<compile_context>
chip_gen: v7x
topology: tpu7x:2x2x1
jax: 0.10.0
libtpu: 0.0.40
codegen_flags: <defaults>
</compile_context>

<pallas_src>
import math
import functools

import jax
import jax.numpy as jnp
from jax.experimental import pallas as pl
from jax.experimental.pallas import tpu as pltpu


# MXU operand dtype (accumulation is always fp32 via preferred_element_type).
COMPUTE_DTYPE = jnp.bfloat16
VMEM_LIMIT_BYTES = 48 * 1024 * 1024   # < v7x 64 MiB physical; > v6e 32 MiB default


# ----------------------------- in-kernel helpers -----------------------------

def _gelu(x):
    # tanh-approximation of GELU.
    # TODO(synk): switch to exact erf-GELU (or ReLU) if the reference
    # TransformerEncoderLayer uses a different activation.
    c = math.sqrt(2.0 / math.pi)
    return 0.5 * x * (1.0 + jnp.tanh(c * (x + 0.044715 * x * x * x)))


def _layernorm(x, g, b, eps=1e-5):
    mu = jnp.mean(x, axis=-1, keepdims=True)
    var = jnp.mean((x - mu) ** 2, axis=-1, keepdims=True)
    return (x - mu) * jax.lax.rsqrt(var + eps) * g + b


# --------------------------- fused encoder kernel -----------------------------

def _encoder_kernel(num_heads, mlp_chunk,
                    p_ref, pw_ref, pb_ref, pos_ref,
                    wqkv_ref, bqkv_ref, wo_ref, bo_ref,
                    ln1g_ref, ln1b_ref,
                    w1_ref, b1_ref, w2_ref, b2_ref,
                    ln2g_ref, ln2b_ref,
                    o_ref,
                    x_ref, qkv_ref, ctx_ref):
    """Grid = (batch_tile, layer).

    x_ref   : (R, H)      fp32 residual stream, VMEM-resident across layers.
    qkv_ref : (Bt, N, 3H) bf16 staging for the fused QKV projection.
    ctx_ref : (Bt, N, H)  fp32 attention context (lane-dense slab writes).
    """
    l = pl.program_id(1)
    n_layers = pl.num_programs(1)

    Bt, N, H = ctx_ref.shape
    R = Bt * N
    dh = H // num_heads
    scale = 1.0 / math.sqrt(dh)
    cdt = wqkv_ref.dtype              # MXU operand dtype (bf16)
    I = w1_ref.shape[2]

    # heads per context-write slab -> lane-dense stores (>=128 wide when possible)
    group = max(1, 128 // dh)
    group = math.gcd(group, num_heads)
    gw = group * dh

    # ---- patch + position embedding (first layer step only) ----
    @pl.when(l == 0)
    def _():
        emb = jnp.dot(p_ref[...].reshape(R, -1), pw_ref[...],
                      preferred_element_type=jnp.float32)          # (R, H) fp32
        emb = emb.reshape(Bt, N, H) + pb_ref[...] + pos_ref[...]
        x_ref[...] = emb.reshape(R, H)                             # one dense store

    # ---- fused QKV projection: one (R,H)x(H,3H) MXU pass ----
    qkv = jnp.dot(x_ref[...].astype(cdt), wqkv_ref[0],
                  preferred_element_type=jnp.float32) + bqkv_ref[0]
    qkv_ref[...] = qkv.reshape(Bt, N, 3 * H).astype(cdt)

    # ---- multi-head self-attention ----
    # Dynamic loop over the batch tile (bounded live ranges); heads are a small
    # static loop.  No explicit K transpose: scores contract over dh directly.
    @pl.loop(0, Bt)
    def _(b):
        qkv_b = qkv_ref[b]                       # (N, 3H) bf16
        q_b = qkv_b[:, 0 * H:1 * H]
        k_b = qkv_b[:, 1 * H:2 * H]
        v_b = qkv_b[:, 2 * H:3 * H]
        for g in range(num_heads // group):      # static, small
            parts = []
            for hh in range(group):
                c0 = (g * group + hh) * dh
                q_h = q_b[:, c0:c0 + dh]
                k_h = k_b[:, c0:c0 + dh]
                s = jax.lax.dot_general(
                    q_h, k_h, (((1,), (1,)), ((), ())),
                    preferred_element_type=jnp.float32) * scale    # (N, N) fp32
                s = s - jnp.max(s, axis=-1, keepdims=True)
                e = jnp.exp(s)
                a = e * pl.reciprocal(jnp.sum(e, axis=-1, keepdims=True),
                                      approx=True)
                parts.append(jnp.dot(a.astype(cdt), v_b[:, c0:c0 + dh],
                                     preferred_element_type=jnp.float32))
            slab = parts[0] if group == 1 else jnp.concatenate(parts, axis=1)
            ctx_ref[b, :, g * gw:(g + 1) * gw] = slab              # lane-dense

    attn = jnp.dot(ctx_ref[...].reshape(R, H).astype(cdt), wo_ref[0],
                   preferred_element_type=jnp.float32) + bo_ref[0]
    # dropout (hidden_dropout_prob) is identity in eval mode.
    # Re-read x_ref here (short live range) instead of holding it through attention.
    x1 = _layernorm(x_ref[...] + attn, ln1g_ref[0], ln1b_ref[0])

    # ---- MLP, tiled over the intermediate dimension ----
    # Never materializes the full (R, I) fp32 hidden activation.
    x1c = x1.astype(cdt)
    ff = jnp.zeros((R, H), jnp.float32)
    for c in range(I // mlp_chunk):              # static, small
        c0 = c * mlp_chunk
        hid = _gelu(jnp.dot(x1c, w1_ref[0, :, c0:c0 + mlp_chunk],
                            preferred_element_type=jnp.float32)
                    + b1_ref[0, :, c0:c0 + mlp_chunk])
        ff = ff + jnp.dot(hid.astype(cdt), w2_ref[0, c0:c0 + mlp_chunk, :],
                          preferred_element_type=jnp.float32)
    x2 = _layernorm(x1 + ff + b2_ref[0], ln2g_ref[0], ln2b_ref[0])

    x_ref[...] = x2                  # carry residual stream to the next layer step

    @pl.when(l == n_layers - 1)
    def _():
        o_ref[...] = x2.reshape(Bt, N, H)        # single full-tile store


# ------------------------------- JAX glue -------------------------------------

def extract_patches(x, patch_size, stride):
    """x: (B, C, H, W) NCHW -> (B, N, C*P*P). Assumes stride == patch_size."""
    assert stride == patch_size, "non-overlapping patches assumed"
    B, C, Hh, Ww = x.shape
    P = patch_size
    nh, nw = Hh // P, Ww // P
    p = x.reshape(B, C, nh, P, nw, P)
    p = p.transpose(0, 2, 4, 1, 3, 5)           # (B, nh, nw, C, P, P)
    return p.reshape(B, nh * nw, C * P * P)     # feature order (C,P,P) == conv weight order


def init_params(key, *, in_channels, patch_size, hidden_size, num_hidden_layers,
                intermediate_size, num_embeddings):
    """Per-layer parameters mirroring the PyTorch module structure (fp32)."""
    PD = in_channels * patch_size * patch_size
    H, I = hidden_size, intermediate_size
    keys = jax.random.split(key, 2 + num_hidden_layers)

    def nrm(k, shape):
        return (0.02 * jax.random.normal(k, shape)).astype(jnp.float32)

    params = {
        "patch_w": nrm(keys[0], (PD, H)),
        "patch_b": jnp.zeros((1, H), jnp.float32),
        "pos": nrm(keys[1], (num_embeddings, H)),
        "layers": [],
    }
    for li in range(num_hidden_layers):
        ks = jax.random.split(keys[2 + li], 6)
        params["layers"].append({
            "wq": nrm(ks[0], (H, H)), "bq": jnp.zeros((1, H), jnp.float32),
            "wk": nrm(ks[1], (H, H)), "bk": jnp.zeros((1, H), jnp.float32),
            "wv": nrm(ks[2], (H, H)), "bv": jnp.zeros((1, H), jnp.float32),
            "wo": nrm(ks[3], (H, H)), "bo": jnp.zeros((1, H), jnp.float32),
            "ln1_g": jnp.ones((1, H), jnp.float32), "ln1_b": jnp.zeros((1, H), jnp.float32),
            "w1": nrm(ks[4], (H, I)), "b1": jnp.zeros((1, I), jnp.float32),
            "w2": nrm(ks[5], (I, H)), "b2": jnp.zeros((1, H), jnp.float32),
            "ln2_g": jnp.ones((1, H), jnp.float32), "ln2_b": jnp.zeros((1, H), jnp.float32),
        })
    return params


def pack_params(params, compute_dtype=COMPUTE_DTYPE):
    """Concatenate Q/K/V and stack per-layer weights into (L, ...) tensors.

    Pure repacking — mathematically identical to the per-layer Linear weights.
    Matmul weights are stored in `compute_dtype` (bf16); everything touched by
    fp32 adds / LayerNorm stays fp32.
    """
    layers = params["layers"]

    def stack(key, dtype):
        return jnp.stack([lp[key] for lp in layers]).astype(dtype)

    wqkv = jnp.stack([jnp.concatenate([lp["wq"], lp["wk"], lp["wv"]], axis=1)
                      for lp in layers]).astype(compute_dtype)       # (L, H, 3H)
    bqkv = jnp.stack([jnp.concatenate([lp["bq"], lp["bk"], lp["bv"]], axis=1)
                      for lp in layers])                             # (L, 1, 3H) fp32
    return {
        "patch_w": params["patch_w"].astype(compute_dtype),
        "patch_b": params["patch_b"],
        "pos": params["pos"],
        "wqkv": wqkv, "bqkv": bqkv,
        "wo": stack("wo", compute_dtype), "bo": stack("bo", jnp.float32),
        "ln1_g": stack("ln1_g", jnp.float32), "ln1_b": stack("ln1_b", jnp.float32),
        "w1": stack("w1", compute_dtype), "b1": stack("b1", jnp.float32),
        "w2": stack("w2", compute_dtype), "b2": stack("b2", jnp.float32),
        "ln2_g": stack("ln2_g", jnp.float32), "ln2_b": stack("ln2_b", jnp.float32),
    }


def transformer_encoder(x, packed, *, patch_size, stride, num_heads,
                        batch_tile=None, mlp_chunk=512):
    # bf16 patches: halves patch DMA bytes / VMEM; they are MXU operands anyway.
    patches = extract_patches(x, patch_size, stride).astype(COMPUTE_DTYPE)
    B, N, PD = patches.shape
    H = packed["patch_w"].shape[1]
    L = packed["wqkv"].shape[0]
    I = packed["w1"].shape[2]
    assert H % num_heads == 0
    assert packed["pos"].shape[0] == N

    if batch_tile is None:
        # keep >= 2 batch tiles when possible so the "parallel" batch axis can
        # actually shard across v7x's two TensorCores
        batch_tile = B // 2 if (B % 2 == 0 and B >= 2) else B
    Bt = batch_tile
    assert B % Bt == 0, "batch must be divisible by batch_tile"
    R = Bt * N

    mlp_chunk = min(mlp_chunk, I)
    assert I % mlp_chunk == 0, "intermediate_size must be divisible by mlp_chunk"

    # advisory cost estimate for XLA scheduling around the custom call
    flops_per_tile = (2 * R * PD * H
                      + L * (2 * R * H * 3 * H      # fused QKV
                             + 4 * R * N * H        # scores + context
                             + 2 * R * H * H        # output proj
                             + 4 * R * H * I))      # MLP
    flops = flops_per_tile * (B // Bt)
    transcendentals = (B // Bt) * L * (num_heads * Bt * N * N + R * I)
    bytes_weights = sum(int(v.size) * v.dtype.itemsize for v in packed.values())
    bytes_accessed = (int(patches.size) * patches.dtype.itemsize
                      + B * N * H * 4 + bytes_weights)

    def cspec(shape):               # layer-constant operand
        nd = len(shape)
        return pl.BlockSpec(shape, lambda b, l: (0,) * nd)

    def lspec(shape):               # per-layer stacked operand, indexed by l
        nd = len(shape)
        return pl.BlockSpec((1,) + shape, lambda b, l: (l,) + (0,) * nd)

    in_specs = [
        pl.BlockSpec((Bt, N, PD), lambda b, l: (b, 0, 0)),   # patches (bf16)
        cspec((PD, H)),                                      # patch_w
        cspec((1, H)),                                       # patch_b
        cspec((N, H)),                                       # pos
        lspec((H, 3 * H)), lspec((1, 3 * H)),                # wqkv, bqkv
        lspec((H, H)), lspec((1, H)),                        # wo, bo
        lspec((1, H)), lspec((1, H)),                        # ln1 gamma, beta
        lspec((H, I)), lspec((1, I)),                        # w1, b1
        lspec((I, H)), lspec((1, H)),                        # w2, b2
        lspec((1, H)), lspec((1, H)),                        # ln2 gamma, beta
    ]

    return pl.pallas_call(
        functools.partial(_encoder_kernel, num_heads, mlp_chunk),
        out_shape=jax.ShapeDtypeStruct((B, N, H), jnp.float32),
        grid=(B // Bt, L),
        in_specs=in_specs,
        out_specs=pl.BlockSpec((Bt, N, H), lambda b, l: (b, 0, 0)),
        scratch_shapes=[pltpu.VMEM((R, H), jnp.float32),            # residual stream
                        pltpu.VMEM((Bt, N, 3 * H), COMPUTE_DTYPE),  # QKV staging
                        pltpu.VMEM((Bt, N, H), jnp.float32)],       # attention context
        compiler_params=pltpu.CompilerParams(
            dimension_semantics=("parallel", "arbitrary"),
            vmem_limit_bytes=VMEM_LIMIT_BYTES),
        cost_estimate=pl.CostEstimate(
            flops=int(flops),
            transcendentals=int(transcendentals),
            bytes_accessed=int(bytes_accessed)),
    )(patches,
      packed["patch_w"], packed["patch_b"], packed["pos"],
      packed["wqkv"], packed["bqkv"], packed["wo"], packed["bo"],
      packed["ln1_g"], packed["ln1_b"],
      packed["w1"], packed["b1"], packed["w2"], packed["b2"],
      packed["ln2_g"], packed["ln2_b"])


# --------------------------------- main ---------------------------------------

if __name__ == "__main__":
    # config
    batch, channels, spatial = 2, 4, 16
    patch_size = stride = 4
    hidden_size = 32
    num_hidden_layers = 2
    num_attention_heads = 4
    intermediate_size = 64
    num_embeddings = (spatial // patch_size) ** 2   # 16 patches

    key = jax.random.PRNGKey(0)
    kx, kp = jax.random.split(key)
    x = jax.random.normal(kx, (batch, channels, spatial, spatial), jnp.float32)

    params = init_params(
        kp,
        in_channels=channels,
        patch_size=patch_size,
        hidden_size=hidden_size,
        num_hidden_layers=num_hidden_layers,
        intermediate_size=intermediate_size,
        num_embeddings=num_embeddings,
    )
    packed = pack_params(params)

    out = transformer_encoder(
        x, packed, patch_size=patch_size, stride=stride,
        num_heads=num_attention_heads,
    )
    out = jax.block_until_ready(out)
    assert out.shape == (batch, num_embeddings, hidden_size)
    print("KERNEL_OK")
</pallas_src>

<mosaic_0001>
module attributes {stable_mosaic.version = 11 : i64} {
  func.func @_encoder_kernel(%arg0: i32, %arg1: i32, %arg2: memref<1x16x64xbf16, #tpu.memory_space<vmem>>, %arg3: memref<64x32xbf16, #tpu.memory_space<vmem>>, %arg4: memref<1x32xf32, #tpu.memory_space<vmem>>, %arg5: memref<16x32xf32, #tpu.memory_space<vmem>>, %arg6: memref<1x32x96xbf16, #tpu.memory_space<vmem>>, %arg7: memref<1x1x96xf32, #tpu.memory_space<vmem>>, %arg8: memref<1x32x32xbf16, #tpu.memory_space<vmem>>, %arg9: memref<1x1x32xf32, #tpu.memory_space<vmem>>, %arg10: memref<1x1x32xf32, #tpu.memory_space<vmem>>, %arg11: memref<1x1x32xf32, #tpu.memory_space<vmem>>, %arg12: memref<1x32x64xbf16, #tpu.memory_space<vmem>>, %arg13: memref<1x1x64xf32, #tpu.memory_space<vmem>>, %arg14: memref<1x64x32xbf16, #tpu.memory_space<vmem>>, %arg15: memref<1x1x32xf32, #tpu.memory_space<vmem>>, %arg16: memref<1x1x32xf32, #tpu.memory_space<vmem>>, %arg17: memref<1x1x32xf32, #tpu.memory_space<vmem>>, %arg18: memref<1x16x32xf32, #tpu.memory_space<vmem>>, %arg19: memref<16x32xf32, #tpu.memory_space<vmem>>, %arg20: memref<1x16x96xbf16, #tpu.memory_space<vmem>>, %arg21: memref<1x16x32xf32, #tpu.memory_space<vmem>>) attributes {dimension_semantics = [#tpu.dimension_semantics<parallel>, #tpu.dimension_semantics<arbitrary>], iteration_bounds = array<i64: 2, 2>, scalar_prefetch = 0 : i64, scratch_operands = 3 : i64, tpu.core_type = #tpu.core_type<tc>, window_params = [{transform_indices = @transform_0, window_bounds = array<i64: 1, 16, 64>}, {pipeline_mode = #tpu.pipeline_mode<synchronous>, transform_indices = @transform_1, window_bounds = array<i64: 64, 32>}, {pipeline_mode = #tpu.pipeline_mode<synchronous>, transform_indices = @transform_2, window_bounds = array<i64: 1, 32>}, {pipeline_mode = #tpu.pipeline_mode<synchronous>, transform_indices = @transform_3, window_bounds = array<i64: 16, 32>}, {transform_indices = @transform_4, window_bounds = array<i64: 1, 32, 96>}, {transform_indices = @transform_5, window_bounds = array<i64: 1, 1, 96>}, {transform_indices = @transform_6, window_bounds = array<i64: 1, 32, 32>}, {transform_indices = @transform_7, window_bounds = array<i64: 1, 1, 32>}, {transform_indices = @transform_8, window_bounds = array<i64: 1, 1, 32>}, {transform_indices = @transform_9, window_bounds = array<i64: 1, 1, 32>}, {transform_indices = @transform_10, window_bounds = array<i64: 1, 32, 64>}, {transform_indices = @transform_11, window_bounds = array<i64: 1, 1, 64>}, {transform_indices = @transform_12, window_bounds = array<i64: 1, 64, 32>}, {transform_indices = @transform_13, window_bounds = array<i64: 1, 1, 32>}, {transform_indices = @transform_14, window_bounds = array<i64: 1, 1, 32>}, {transform_indices = @transform_15, window_bounds = array<i64: 1, 1, 32>}, {transform_indices = @transform_16, window_bounds = array<i64: 1, 16, 32>}]} {
    %c0_i32 = arith.constant 0 : i32
    %0 = arith.cmpi eq, %arg1, %c0_i32 : i32
    %1 = arith.extui %0 : i1 to i32
    %c0_i32_0 = arith.constant 0 : i32
    %2 = arith.cmpi ne, %1, %c0_i32_0 : i32
    scf.if %2 {
      %c0_95 = arith.constant 0 : index
      %c0_96 = arith.constant 0 : index
      %c0_97 = arith.constant 0 : index
      %200 = vector.load %arg2[%c0_95, %c0_96, %c0_97] : memref<1x16x64xbf16, #tpu.memory_space<vmem>>, vector<1x16x64xbf16>
      %201 = vector.shape_cast %200 : vector<1x16x64xbf16> to vector<16x64xbf16>
      %c0_98 = arith.constant 0 : index
      %c0_99 = arith.constant 0 : index
      %202 = vector.load %arg3[%c0_98, %c0_99] : memref<64x32xbf16, #tpu.memory_space<vmem>>, vector<64x32xbf16>
      %cst_100 = arith.constant dense<0.000000e+00> : vector<16x32xf32>
      %203 = tpu.matmul %201, %202, %cst_100 {dimension_numbers = #tpu.dot_dimension_numbers<[1], [0], [0], [1], [0, 0, 1, 1], [], []>} : vector<16x64xbf16>, vector<64x32xbf16>, vector<16x32xf32> -> vector<16x32xf32>
      %204 = vector.shape_cast %203 : vector<16x32xf32> to vector<1x16x32xf32>
      %c0_101 = arith.constant 0 : index
      %c0_102 = arith.constant 0 : index
      %205 = vector.load %arg4[%c0_101, %c0_102] : memref<1x32xf32, #tpu.memory_space<vmem>>, vector<1x32xf32>
      %206 = vector.shape_cast %205 : vector<1x32xf32> to vector<1x1x32xf32>
      %207 = vector.broadcast %206 : vector<1x1x32xf32> to vector<1x16x32xf32>
      %208 = arith.addf %204, %207 : vector<1x16x32xf32>
      %c0_103 = arith.constant 0 : index
      %c0_104 = arith.constant 0 : index
      %209 = vector.load %arg5[%c0_103, %c0_104] : memref<16x32xf32, #tpu.memory_space<vmem>>, vector<16x32xf32>
      %210 = vector.shape_cast %209 : vector<16x32xf32> to vector<1x16x32xf32>
      %211 = arith.addf %208, %210 : vector<1x16x32xf32>
      %212 = vector.shape_cast %211 : vector<1x16x32xf32> to vector<16x32xf32>
      %c0_105 = arith.constant 0 : index
      %c0_106 = arith.constant 0 : index
      %213 = vector.load %arg19[%c0_105, %c0_106] : memref<16x32xf32, #tpu.memory_space<vmem>>, vector<16x32xf32>
      tpu.vector_store %arg19[%c0_105, %c0_106], %212 {strides = array<i32>} : memref<16x32xf32, #tpu.memory_space<vmem>>, vector<16x32xf32>,
    } else {
    }
    %c0 = arith.constant 0 : index
    %c0_1 = arith.constant 0 : index
    %3 = vector.load %arg19[%c0, %c0_1] : memref<16x32xf32, #tpu.memory_space<vmem>>, vector<16x32xf32>
    %4 = arith.truncf %3 : vector<16x32xf32> to vector<16x32xbf16>
    %c0_2 = arith.constant 0 : index
    %c0_3 = arith.constant 0 : index
    %c0_4 = arith.constant 0 : index
    %5 = vector.load %arg6[%c0_2, %c0_3, %c0_4] : memref<1x32x96xbf16, #tpu.memory_space<vmem>>, vector<1x32x96xbf16>
    %6 = vector.shape_cast %5 : vector<1x32x96xbf16> to vector<32x96xbf16>
    %cst = arith.constant dense<0.000000e+00> : vector<16x96xf32>
    %7 = tpu.matmul %4, %6, %cst {dimension_numbers = #tpu.dot_dimension_numbers<[1], [0], [0], [1], [0, 0, 1, 1], [], []>} : vector<16x32xbf16>, vector<32x96xbf16>, vector<16x96xf32> -> vector<16x96xf32>
    %c0_5 = arith.constant 0 : index
    %c0_6 = arith.constant 0 : index
    %c0_7 = arith.constant 0 : index
    %8 = vector.load %arg7[%c0_5, %c0_6, %c0_7] : memref<1x1x96xf32, #tpu.memory_space<vmem>>, vector<1x1x96xf32>
    %9 = vector.shape_cast %8 : vector<1x1x96xf32> to vector<1x96xf32>
    %10 = vector.broadcast %9 : vector<1x96xf32> to vector<16x96xf32>
    %11 = arith.addf %7, %10 : vector<16x96xf32>
    %12 = vector.shape_cast %11 : vector<16x96xf32> to vector<1x16x96xf32>
    %13 = arith.truncf %12 : vector<1x16x96xf32> to vector<1x16x96xbf16>
    %c0_8 = arith.constant 0 : index
    %c0_9 = arith.constant 0 : index
    %c0_10 = arith.constant 0 : index
    %14 = vector.load %arg20[%c0_8, %c0_9, %c0_10] : memref<1x16x96xbf16, #tpu.memory_space<vmem>>, vector<1x16x96xbf16>
    tpu.vector_store %arg20[%c0_8, %c0_9, %c0_10], %13 {strides = array<i32>} : memref<1x16x96xbf16, #tpu.memory_space<vmem>>, vector<1x16x96xbf16>,
    %c0_i32_11 = arith.constant 0 : i32
    %c1_i32 = arith.constant 1 : i32
    %15 = arith.muli %c0_i32_11, %c1_i32 : i32
    %c0_i32_12 = arith.constant 0 : i32
    %16 = arith.addi %c0_i32_12, %15 : i32
    %17 = arith.index_cast %16 : i32 to index
    %c0_13 = arith.constant 0 : index
    %c0_14 = arith.constant 0 : index
    %18 = vector.load %arg20[%17, %c0_13, %c0_14] : memref<1x16x96xbf16, #tpu.memory_space<vmem>>, vector<1x16x96xbf16>
    %19 = vector.shape_cast %18 : vector<1x16x96xbf16> to vector<16x96xbf16>
    %20 = vector.extract_strided_slice %19 {offsets = [0, 0], sizes = [16, 32], strides = [1, 1]} : vector<16x96xbf16> to vector<16x32xbf16>
    %21 = vector.extract_strided_slice %19 {offsets = [0, 32], sizes = [16, 32], strides = [1, 1]} : vector<16x96xbf16> to vector<16x32xbf16>
    %22 = vector.extract_strided_slice %19 {offsets = [0, 64], sizes = [16, 32], strides = [1, 1]} : vector<16x96xbf16> to vector<16x32xbf16>
    %23 = vector.extract_strided_slice %20 {offsets = [0, 0], sizes = [16, 8], strides = [1, 1]} : vector<16x32xbf16> to vector<16x8xbf16>
    %24 = vector.extract_strided_slice %21 {offsets = [0, 0], sizes = [16, 8], strides = [1, 1]} : vector<16x32xbf16> to vector<16x8xbf16>
    %cst_15 = arith.constant dense<0.000000e+00> : vector<16x16xf32>
    %25 = tpu.matmul %23, %24, %cst_15 {dimension_numbers = #tpu.dot_dimension_numbers<[1], [1], [0], [0], [0, 0, 1, 0], [], []>} : vector<16x8xbf16>, vector<16x8xbf16>, vector<16x16xf32> -> vector<16x16xf32>
    %cst_16 = arith.constant 0.353553385 : f32
    %26 = vector.broadcast %cst_16 : f32 to vector<16x16xf32>
    %27 = arith.mulf %25, %26 : vector<16x16xf32>
    %cst_17 = arith.constant dense<0xFF800000> : vector<16xf32>
    %28 = vector.multi_reduction <maximumf>, %27, %cst_17 [1] : vector<16x16xf32> to vector<16xf32>
    %29 = vector.shape_cast %28 : vector<16xf32> to vector<16x1xf32>
    %30 = vector.broadcast %29 : vector<16x1xf32> to vector<16x16xf32>
    %31 = arith.subf %27, %30 : vector<16x16xf32>
    %32 = math.exp %31 : vector<16x16xf32>
    %cst_18 = arith.constant dense<0.000000e+00> : vector<16xf32>
    %33 = vector.multi_reduction <add>, %32, %cst_18 [1] : vector<16x16xf32> to vector<16xf32>
    %34 = vector.shape_cast %33 : vector<16xf32> to vector<16x1xf32>
    %35 = tpu.reciprocal %34 {approx = true} : vector<16x1xf32> -> vector<16x1xf32>
    %36 = vector.broadcast %35 : vector<16x1xf32> to vector<16x16xf32>
    %37 = arith.mulf %32, %36 : vector<16x16xf32>
    %38 = arith.truncf %37 : vector<16x16xf32> to vector<16x16xbf16>
    %39 = vector.extract_strided_slice %22 {offsets = [0, 0], sizes = [16, 8], strides = [1, 1]} : vector<16x32xbf16> to vector<16x8xbf16>
    %cst_19 = arith.constant dense<0.000000e+00> : vector<16x8xf32>
    %40 = tpu.matmul %38, %39, %cst_19 {dimension_numbers = #tpu.dot_dimension_numbers<[1], [0], [0], [1], [0, 0, 1, 1], [], []>} : vector<16x16xbf16>, vector<16x8xbf16>, vector<16x8xf32> -> vector<16x8xf32>
    %41 = vector.extract_strided_slice %20 {offsets = [0, 8], sizes = [16, 8], strides = [1, 1]} : vector<16x32xbf16> to vector<16x8xbf16>
    %42 = vector.extract_strided_slice %21 {offsets = [0, 8], sizes = [16, 8], strides = [1, 1]} : vector<16x32xbf16> to vector<16x8xbf16>
    %cst_20 = arith.constant dense<0.000000e+00> : vector<16x16xf32>
    %43 = tpu.matmul %41, %42, %cst_20 {dimension_numbers = #tpu.dot_dimension_numbers<[1], [1], [0], [0], [0, 0, 1, 0], [], []>} : vector<16x8xbf16>, vector<16x8xbf16>, vector<16x16xf32> -> vector<16x16xf32>
    %cst_21 = arith.constant 0.353553385 : f32
    %44 = vector.broadcast %cst_21 : f32 to vector<16x16xf32>
    %45 = arith.mulf %43, %44 : vector<16x16xf32>
    %cst_22 = arith.constant dense<0xFF800000> : vector<16xf32>
    %46 = vector.multi_reduction <maximumf>, %45, %cst_22 [1] : vector<16x16xf32> to vector<16xf32>
    %47 = vector.shape_cast %46 : vector<16xf32> to vector<16x1xf32>
    %48 = vector.broadcast %47 : vector<16x1xf32> to vector<16x16xf32>
    %49 = arith.subf %45, %48 : vector<16x16xf32>
    %50 = math.exp %49 : vector<16x16xf32>
    %cst_23 = arith.constant dense<0.000000e+00> : vector<16xf32>
    %51 = vector.multi_reduction <add>, %50, %cst_23 [1] : vector<16x16xf32> to vector<16xf32>
    %52 = vector.shape_cast %51 : vector<16xf32> to vector<16x1xf32>
    %53 = tpu.reciprocal %52 {approx = true} : vector<16x1xf32> -> vector<16x1xf32>
    %54 = vector.broadcast %53 : vector<16x1xf32> to vector<16x16xf32>
    %55 = arith.mulf %50, %54 : vector<16x16xf32>
    %56 = arith.truncf %55 : vector<16x16xf32> to vector<16x16xbf16>
    %57 = vector.extract_strided_slice %22 {offsets = [0, 8], sizes = [16, 8], strides = [1, 1]} : vector<16x32xbf16> to vector<16x8xbf16>
    %cst_24 = arith.constant dense<0.000000e+00> : vector<16x8xf32>
    %58 = tpu.matmul %56, %57, %cst_24 {dimension_numbers = #tpu.dot_dimension_numbers<[1], [0], [0], [1], [0, 0, 1, 1], [], []>} : vector<16x16xbf16>, vector<16x8xbf16>, vector<16x8xf32> -> vector<16x8xf32>
    %59 = vector.extract_strided_slice %20 {offsets = [0, 16], sizes = [16, 8], strides = [1, 1]} : vector<16x32xbf16> to vector<16x8xbf16>
    %60 = vector.extract_strided_slice %21 {offsets = [0, 16], sizes = [16, 8], strides = [1, 1]} : vector<16x32xbf16> to vector<16x8xbf16>
    %cst_25 = arith.constant dense<0.000000e+00> : vector<16x16xf32>
    %61 = tpu.matmul %59, %60, %cst_25 {dimension_numbers = #tpu.dot_dimension_numbers<[1], [1], [0], [0], [0, 0, 1, 0], [], []>} : vector<16x8xbf16>, vector<16x8xbf16>, vector<16x16xf32> -> vector<16x16xf32>
    %cst_26 = arith.constant 0.353553385 : f32
    %62 = vector.broadcast %cst_26 : f32 to vector<16x16xf32>
    %63 = arith.mulf %61, %62 : vector<16x16xf32>
    %cst_27 = arith.constant dense<0xFF800000> : vector<16xf32>
    %64 = vector.multi_reduction <maximumf>, %63, %cst_27 [1] : vector<16x16xf32> to vector<16xf32>
    %65 = vector.shape_cast %64 : vector<16xf32> to vector<16x1xf32>
    %66 = vector.broadcast %65 : vector<16x1xf32> to vector<16x16xf32>
    %67 = arith.subf %63, %66 : vector<16x16xf32>
    %68 = math.exp %67 : vector<16x16xf32>
    %cst_28 = arith.constant dense<0.000000e+00> : vector<16xf32>
    %69 = vector.multi_reduction <add>, %68, %cst_28 [1] : vector<16x16xf32> to vector<16xf32>
    %70 = vector.shape_cast %69 : vector<16xf32> to vector<16x1xf32>
    %71 = tpu.reciprocal %70 {approx = true} : vector<16x1xf32> -> vector<16x1xf32>
    %72 = vector.broadcast %71 : vector<16x1xf32> to vector<16x16xf32>
    %73 = arith.mulf %68, %72 : vector<16x16xf32>
    %74 = arith.truncf %73 : vector<16x16xf32> to vector<16x16xbf16>
    %75 = vector.extract_strided_slice %22 {offsets = [0, 16], sizes = [16, 8], strides = [1, 1]} : vector<16x32xbf16> to vector<16x8xbf16>
    %cst_29 = arith.constant dense<0.000000e+00> : vector<16x8xf32>
    %76 = tpu.matmul %74, %75, %cst_29 {dimension_numbers = #tpu.dot_dimension_numbers<[1], [0], [0], [1], [0, 0, 1, 1], [], []>} : vector<16x16xbf16>, vector<16x8xbf16>, vector<16x8xf32> -> vector<16x8xf32>
    %77 = vector.extract_strided_slice %20 {offsets = [0, 24], sizes = [16, 8], strides = [1, 1]} : vector<16x32xbf16> to vector<16x8xbf16>
    %78 = vector.extract_strided_slice %21 {offsets = [0, 24], sizes = [16, 8], strides = [1, 1]} : vector<16x32xbf16> to vector<16x8xbf16>
    %cst_30 = arith.constant dense<0.000000e+00> : vector<16x16xf32>
    %79 = tpu.matmul %77, %78, %cst_30 {dimension_numbers = #tpu.dot_dimension_numbers<[1], [1], [0], [0], [0, 0, 1, 0], [], []>} : vector<16x8xbf16>, vector<16x8xbf16>, vector<16x16xf32> -> vector<16x16xf32>
    %cst_31 = arith.constant 0.353553385 : f32
    %80 = vector.broadcast %cst_31 : f32 to vector<16x16xf32>
    %81 = arith.mulf %79, %80 : vector<16x16xf32>
    %cst_32 = arith.constant dense<0xFF800000> : vector<16xf32>
    %82 = vector.multi_reduction <maximumf>, %81, %cst_32 [1] : vector<16x16xf32> to vector<16xf32>
    %83 = vector.shape_cast %82 : vector<16xf32> to vector<16x1xf32>
    %84 = vector.broadcast %83 : vector<16x1xf32> to vector<16x16xf32>
    %85 = arith.subf %81, %84 : vector<16x16xf32>
    %86 = math.exp %85 : vector<16x16xf32>
    %cst_33 = arith.constant dense<0.000000e+00> : vector<16xf32>
    %87 = vector.multi_reduction <add>, %86, %cst_33 [1] : vector<16x16xf32> to vector<16xf32>
    %88 = vector.shape_cast %87 : vector<16xf32> to vector<16x1xf32>
    %89 = tpu.reciprocal %88 {approx = true} : vector<16x1xf32> -> vector<16x1xf32>
    %90 = vector.broadcast %89 : vector<16x1xf32> to vector<16x16xf32>
    %91 = arith.mulf %86, %90 : vector<16x16xf32>
    %92 = arith.truncf %91 : vector<16x16xf32> to vector<16x16xbf16>
    %93 = vector.extract_strided_slice %22 {offsets = [0, 24], sizes = [16, 8], strides = [1, 1]} : vector<16x32xbf16> to vector<16x8xbf16>
    %cst_34 = arith.constant dense<0.000000e+00> : vector<16x8xf32>
    %94 = tpu.matmul %92, %93, %cst_34 {dimension_numbers = #tpu.dot_dimension_numbers<[1], [0], [0], [1], [0, 0, 1, 1], [], []>} : vector<16x16xbf16>, vector<16x8xbf16>, vector<16x8xf32> -> vector<16x8xf32>
    %95 = tpu.concatenate %40, %58, %76, %94 in 1 : vector<16x8xf32>, vector<16x8xf32>, vector<16x8xf32>, vector<16x8xf32> -> vector<16x32xf32>
    %96 = arith.index_cast %16 : i32 to index
    %c0_35 = arith.constant 0 : index
    %c0_36 = arith.constant 0 : index
    %97 = vector.load %arg21[%96, %c0_35, %c0_36] : memref<1x16x32xf32, #tpu.memory_space<vmem>>, vector<1x16x32xf32>
    %98 = vector.shape_cast %97 : vector<1x16x32xf32> to vector<16x32xf32>
    %99 = vector.shape_cast %95 : vector<16x32xf32> to vector<1x16x32xf32>
    tpu.vector_store %arg21[%96, %c0_35, %c0_36], %99 {strides = array<i32>} : memref<1x16x32xf32, #tpu.memory_space<vmem>>, vector<1x16x32xf32>,
    %c1_i32_37 = arith.constant 1 : i32
    %c0_38 = arith.constant 0 : index
    %c0_39 = arith.constant 0 : index
    %c0_40 = arith.constant 0 : index
    %100 = vector.load %arg21[%c0_38, %c0_39, %c0_40] : memref<1x16x32xf32, #tpu.memory_space<vmem>>, vector<1x16x32xf32>
    %101 = vector.shape_cast %100 : vector<1x16x32xf32> to vector<16x32xf32>
    %102 = arith.truncf %101 : vector<16x32xf32> to vector<16x32xbf16>
    %c0_41 = arith.constant 0 : index
    %c0_42 = arith.constant 0 : index
    %c0_43 = arith.constant 0 : index
    %103 = vector.load %arg8[%c0_41, %c0_42, %c0_43] : memref<1x32x32xbf16, #tpu.memory_space<vmem>>, vector<1x32x32xbf16>
    %104 = vector.shape_cast %103 : vector<1x32x32xbf16> to vector<32x32xbf16>
    %cst_44 = arith.constant dense<0.000000e+00> : vector<16x32xf32>
    %105 = tpu.matmul %102, %104, %cst_44 {dimension_numbers = #tpu.dot_dimension_numbers<[1], [0], [0], [1], [0, 0, 1, 1], [], []>} : vector<16x32xbf16>, vector<32x32xbf16>, vector<16x32xf32> -> vector<16x32xf32>
    %c0_45 = arith.constant 0 : index
    %c0_46 = arith.constant 0 : index
    %c0_47 = arith.constant 0 : index
    %106 = vector.load %arg9[%c0_45, %c0_46, %c0_47] : memref<1x1x32xf32, #tpu.memory_space<vmem>>, vector<1x1x32xf32>
    %107 = vector.shape_cast %106 : vector<1x1x32xf32> to vector<1x32xf32>
    %108 = vector.broadcast %107 : vector<1x32xf32> to vector<16x32xf32>
    %109 = arith.addf %105, %108 : vector<16x32xf32>
    %c0_48 = arith.constant 0 : index
    %c0_49 = arith.constant 0 : index
    %110 = vector.load %arg19[%c0_48, %c0_49] : memref<16x32xf32, #tpu.memory_space<vmem>>, vector<16x32xf32>
    %111 = arith.addf %110, %109 : vector<16x32xf32>
    %c0_50 = arith.constant 0 : index
    %c0_51 = arith.constant 0 : index
    %c0_52 = arith.constant 0 : index
    %112 = vector.load %arg10[%c0_50, %c0_51, %c0_52] : memref<1x1x32xf32, #tpu.memory_space<vmem>>, vector<1x1x32xf32>
    %113 = vector.shape_cast %112 : vector<1x1x32xf32> to vector<1x32xf32>
    %c0_53 = arith.constant 0 : index
    %c0_54 = arith.constant 0 : index
    %c0_55 = arith.constant 0 : index
    %114 = vector.load %arg11[%c0_53, %c0_54, %c0_55] : memref<1x1x32xf32, #tpu.memory_space<vmem>>, vector<1x1x32xf32>
    %115 = vector.shape_cast %114 : vector<1x1x32xf32> to vector<1x32xf32>
    %cst_56 = arith.constant dense<0.000000e+00> : vector<16xf32>
    %116 = vector.multi_reduction <add>, %111, %cst_56 [1] : vector<16x32xf32> to vector<16xf32>
    %117 = vector.shape_cast %116 : vector<16xf32> to vector<16x1xf32>
    %cst_57 = arith.constant 3.200000e+01 : f32
    %118 = vector.broadcast %cst_57 : f32 to vector<16x1xf32>
    %119 = arith.divf %117, %118 : vector<16x1xf32>
    %120 = vector.broadcast %119 : vector<16x1xf32> to vector<16x32xf32>
    %121 = arith.subf %111, %120 : vector<16x32xf32>
    %122 = arith.mulf %121, %121 : vector<16x32xf32>
    %cst_58 = arith.constant dense<0.000000e+00> : vector<16xf32>
    %123 = vector.multi_reduction <add>, %122, %cst_58 [1] : vector<16x32xf32> to vector<16xf32>
    %124 = vector.shape_cast %123 : vector<16xf32> to vector<16x1xf32>
    %cst_59 = arith.constant 3.200000e+01 : f32
    %125 = vector.broadcast %cst_59 : f32 to vector<16x1xf32>
    %126 = arith.divf %124, %125 : vector<16x1xf32>
    %127 = vector.broadcast %119 : vector<16x1xf32> to vector<16x32xf32>
    %128 = arith.subf %111, %127 : vector<16x32xf32>
    %cst_60 = arith.constant 9.99999974E-6 : f32
    %129 = vector.broadcast %cst_60 : f32 to vector<16x1xf32>
    %130 = arith.addf %126, %129 : vector<16x1xf32>
    %131 = math.rsqrt %130 : vector<16x1xf32>
    %132 = vector.broadcast %131 : vector<16x1xf32> to vector<16x32xf32>
    %133 = arith.mulf %128, %132 : vector<16x32xf32>
    %134 = vector.broadcast %113 : vector<1x32xf32> to vector<16x32xf32>
    %135 = arith.mulf %133, %134 : vector<16x32xf32>
    %136 = vector.broadcast %115 : vector<1x32xf32> to vector<16x32xf32>
    %137 = arith.addf %135, %136 : vector<16x32xf32>
    %138 = arith.truncf %137 : vector<16x32xf32> to vector<16x32xbf16>
    %cst_61 = arith.constant 0.000000e+00 : f32
    %139 = vector.broadcast %cst_61 : f32 to vector<16x32xf32>
    %c0_62 = arith.constant 0 : index
    %c0_63 = arith.constant 0 : index
    %c0_64 = arith.constant 0 : index
    %140 = vector.load %arg12[%c0_62, %c0_63, %c0_64] : memref<1x32x64xbf16, #tpu.memory_space<vmem>>, vector<1x32x64xbf16>
    %141 = vector.shape_cast %140 : vector<1x32x64xbf16> to vector<32x64xbf16>
    %cst_65 = arith.constant dense<0.000000e+00> : vector<16x64xf32>
    %142 = tpu.matmul %138, %141, %cst_65 {dimension_numbers = #tpu.dot_dimension_numbers<[1], [0], [0], [1], [0, 0, 1, 1], [], []>} : vector<16x32xbf16>, vector<32x64xbf16>, vector<16x64xf32> -> vector<16x64xf32>
    %c0_66 = arith.constant 0 : index
    %c0_67 = arith.constant 0 : index
    %c0_68 = arith.constant 0 : index
    %143 = vector.load %arg13[%c0_66, %c0_67, %c0_68] : memref<1x1x64xf32, #tpu.memory_space<vmem>>, vector<1x1x64xf32>
    %144 = vector.shape_cast %143 : vector<1x1x64xf32> to vector<1x64xf32>
    %145 = vector.broadcast %144 : vector<1x64xf32> to vector<16x64xf32>
    %146 = arith.addf %142, %145 : vector<16x64xf32>
    %cst_69 = arith.constant 5.000000e-01 : f32
    %147 = vector.broadcast %cst_69 : f32 to vector<16x64xf32>
    %148 = arith.mulf %147, %146 : vector<16x64xf32>
    %cst_70 = arith.constant 4.471500e-02 : f32
    %149 = vector.broadcast %cst_70 : f32 to vector<16x64xf32>
    %150 = arith.mulf %149, %146 : vector<16x64xf32>
    %151 = arith.mulf %150, %146 : vector<16x64xf32>
    %152 = arith.mulf %151, %146 : vector<16x64xf32>
    %153 = arith.addf %146, %152 : vector<16x64xf32>
    %cst_71 = arith.constant 0.797884583 : f32
    %154 = vector.broadcast %cst_71 : f32 to vector<16x64xf32>
    %155 = arith.mulf %154, %153 : vector<16x64xf32>
    %156 = math.tanh %155 : vector<16x64xf32>
    %cst_72 = arith.constant 1.000000e+00 : f32
    %157 = vector.broadcast %cst_72 : f32 to vector<16x64xf32>
    %158 = arith.addf %157, %156 : vector<16x64xf32>
    %159 = arith.mulf %148, %158 : vector<16x64xf32>
    %160 = arith.truncf %159 : vector<16x64xf32> to vector<16x64xbf16>
    %c0_73 = arith.constant 0 : index
    %c0_74 = arith.constant 0 : index
    %c0_75 = arith.constant 0 : index
    %161 = vector.load %arg14[%c0_73, %c0_74, %c0_75] : memref<1x64x32xbf16, #tpu.memory_space<vmem>>, vector<1x64x32xbf16>
    %162 = vector.shape_cast %161 : vector<1x64x32xbf16> to vector<64x32xbf16>
    %cst_76 = arith.constant dense<0.000000e+00> : vector<16x32xf32>
    %163 = tpu.matmul %160, %162, %cst_76 {dimension_numbers = #tpu.dot_dimension_numbers<[1], [0], [0], [1], [0, 0, 1, 1], [], []>} : vector<16x64xbf16>, vector<64x32xbf16>, vector<16x32xf32> -> vector<16x32xf32>
    %164 = arith.addf %139, %163 : vector<16x32xf32>
    %165 = arith.addf %137, %164 : vector<16x32xf32>
    %c0_77 = arith.constant 0 : index
    %c0_78 = arith.constant 0 : index
    %c0_79 = arith.constant 0 : index
    %166 = vector.load %arg15[%c0_77, %c0_78, %c0_79] : memref<1x1x32xf32, #tpu.memory_space<vmem>>, vector<1x1x32xf32>
    %167 = vector.shape_cast %166 : vector<1x1x32xf32> to vector<1x32xf32>
    %168 = vector.broadcast %167 : vector<1x32xf32> to vector<16x32xf32>
    %169 = arith.addf %165, %168 : vector<16x32xf32>
    %c0_80 = arith.constant 0 : index
    %c0_81 = arith.constant 0 : index
    %c0_82 = arith.constant 0 : index
    %170 = vector.load %arg16[%c0_80, %c0_81, %c0_82] : memref<1x1x32xf32, #tpu.memory_space<vmem>>, vector<1x1x32xf32>
    %171 = vector.shape_cast %170 : vector<1x1x32xf32> to vector<1x32xf32>
    %c0_83 = arith.constant 0 : index
    %c0_84 = arith.constant 0 : index
    %c0_85 = arith.constant 0 : index
    %172 = vector.load %arg17[%c0_83, %c0_84, %c0_85] : memref<1x1x32xf32, #tpu.memory_space<vmem>>, vector<1x1x32xf32>
    %173 = vector.shape_cast %172 : vector<1x1x32xf32> to vector<1x32xf32>
    %cst_86 = arith.constant dense<0.000000e+00> : vector<16xf32>
    %174 = vector.multi_reduction <add>, %169, %cst_86 [1] : vector<16x32xf32> to vector<16xf32>
    %175 = vector.shape_cast %174 : vector<16xf32> to vector<16x1xf32>
    %cst_87 = arith.constant 3.200000e+01 : f32
    %176 = vector.broadcast %cst_87 : f32 to vector<16x1xf32>
    %177 = arith.divf %175, %176 : vector<16x1xf32>
    %178 = vector.broadcast %177 : vector<16x1xf32> to vector<16x32xf32>
    %179 = arith.subf %169, %178 : vector<16x32xf32>
    %180 = arith.mulf %179, %179 : vector<16x32xf32>
    %cst_88 = arith.constant dense<0.000000e+00> : vector<16xf32>
    %181 = vector.multi_reduction <add>, %180, %cst_88 [1] : vector<16x32xf32> to vector<16xf32>
    %182 = vector.shape_cast %181 : vector<16xf32> to vector<16x1xf32>
    %cst_89 = arith.constant 3.200000e+01 : f32
    %183 = vector.broadcast %cst_89 : f32 to vector<16x1xf32>
    %184 = arith.divf %182, %183 : vector<16x1xf32>
    %185 = vector.broadcast %177 : vector<16x1xf32> to vector<16x32xf32>
    %186 = arith.subf %169, %185 : vector<16x32xf32>
    %cst_90 = arith.constant 9.99999974E-6 : f32
    %187 = vector.broadcast %cst_90 : f32 to vector<16x1xf32>
    %188 = arith.addf %184, %187 : vector<16x1xf32>
    %189 = math.rsqrt %188 : vector<16x1xf32>
    %190 = vector.broadcast %189 : vector<16x1xf32> to vector<16x32xf32>
    %191 = arith.mulf %186, %190 : vector<16x32xf32>
    %192 = vector.broadcast %171 : vector<1x32xf32> to vector<16x32xf32>
    %193 = arith.mulf %191, %192 : vector<16x32xf32>
    %194 = vector.broadcast %173 : vector<1x32xf32> to vector<16x32xf32>
    %195 = arith.addf %193, %194 : vector<16x32xf32>
    %c0_91 = arith.constant 0 : index
    %c0_92 = arith.constant 0 : index
    %196 = vector.load %arg19[%c0_91, %c0_92] : memref<16x32xf32, #tpu.memory_space<vmem>>, vector<16x32xf32>
    tpu.vector_store %arg19[%c0_91, %c0_92], %195 {strides = array<i32>} : memref<16x32xf32, #tpu.memory_space<vmem>>, vector<16x32xf32>,
    %c1_i32_93 = arith.constant 1 : i32
    %197 = arith.cmpi eq, %arg1, %c1_i32_93 : i32
    %198 = arith.extui %197 : i1 to i32
    %c0_i32_94 = arith.constant 0 : i32
    %199 = arith.cmpi ne, %198, %c0_i32_94 : i32
    scf.if %199 {
      %200 = vector.shape_cast %195 : vector<16x32xf32> to vector<1x16x32xf32>
      %c0_95 = arith.constant 0 : index
      %c0_96 = arith.constant 0 : index
      %c0_97 = arith.constant 0 : index
      %201 = vector.load %arg18[%c0_95, %c0_96, %c0_97] : memref<1x16x32xf32, #tpu.memory_space<vmem>>, vector<1x16x32xf32>
      tpu.vector_store %arg18[%c0_95, %c0_96, %c0_97], %200 {strides = array<i32>} : memref<1x16x32xf32, #tpu.memory_space<vmem>>, vector<1x16x32xf32>,
    } else {
    }
    return
  }
  func.func @transform_0(%arg0: i32, %arg1: i32) -> (i32, i32, i32) {
    %c0_i32 = arith.constant 0 : i32
    %c0_i32_0 = arith.constant 0 : i32
    %c0_i32_1 = arith.constant 0 : i32
    return %arg0, %c0_i32, %c0_i32_0 : i32, i32, i32
  }
  func.func @transform_1(%arg0: i32, %arg1: i32) -> (i32, i32) {
    %c0_i32 = arith.constant 0 : i32
    %c0_i32_0 = arith.constant 0 : i32
    %c0_i32_1 = arith.constant 0 : i32
    return %c0_i32, %c0_i32_0 : i32, i32
  }
  func.func @transform_2(%arg0: i32, %arg1: i32) -> (i32, i32) {
    %c0_i32 = arith.constant 0 : i32
    %c0_i32_0 = arith.constant 0 : i32
    %c0_i32_1 = arith.constant 0 : i32
    return %c0_i32, %c0_i32_0 : i32, i32
  }
  func.func @transform_3(%arg0: i32, %arg1: i32) -> (i32, i32) {
    %c0_i32 = arith.constant 0 : i32
    %c0_i32_0 = arith.constant 0 : i32
    %c0_i32_1 = arith.constant 0 : i32
    return %c0_i32, %c0_i32_0 : i32, i32
  }
  func.func @transform_4(%arg0: i32, %arg1: i32) -> (i32, i32, i32) {
    %c0_i32 = arith.constant 0 : i32
    %c0_i32_0 = arith.constant 0 : i32
    %c0_i32_1 = arith.constant 0 : i32
    return %arg1, %c0_i32, %c0_i32_0 : i32, i32, i32
  }
  func.func @transform_5(%arg0: i32, %arg1: i32) -> (i32, i32, i32) {
    %c0_i32 = arith.constant 0 : i32
    %c0_i32_0 = arith.constant 0 : i32
    %c0_i32_1 = arith.constant 0 : i32
    return %arg1, %c0_i32, %c0_i32_0 : i32, i32, i32
  }
  func.func @transform_6(%arg0: i32, %arg1: i32) -> (i32, i32, i32) {
    %c0_i32 = arith.constant 0 : i32
    %c0_i32_0 = arith.constant 0 : i32
    %c0_i32_1 = arith.constant 0 : i32
    return %arg1, %c0_i32, %c0_i32_0 : i32, i32, i32
  }
  func.func @transform_7(%arg0: i32, %arg1: i32) -> (i32, i32, i32) {
    %c0_i32 = arith.constant 0 : i32
    %c0_i32_0 = arith.constant 0 : i32
    %c0_i32_1 = arith.constant 0 : i32
    return %arg1, %c0_i32, %c0_i32_0 : i32, i32, i32
  }
  func.func @transform_8(%arg0: i32, %arg1: i32) -> (i32, i32, i32) {
    %c0_i32 = arith.constant 0 : i32
    %c0_i32_0 = arith.constant 0 : i32
    %c0_i32_1 = arith.constant 0 : i32
    return %arg1, %c0_i32, %c0_i32_0 : i32, i32, i32
  }
  func.func @transform_9(%arg0: i32, %arg1: i32) -> (i32, i32, i32) {
    %c0_i32 = arith.constant 0 : i32
    %c0_i32_0 = arith.constant 0 : i32
    %c0_i32_1 = arith.constant 0 : i32
    return %arg1, %c0_i32, %c0_i32_0 : i32, i32, i32
  }
  func.func @transform_10(%arg0: i32, %arg1: i32) -> (i32, i32, i32) {
    %c0_i32 = arith.constant 0 : i32
    %c0_i32_0 = arith.constant 0 : i32
    %c0_i32_1 = arith.constant 0 : i32
    return %arg1, %c0_i32, %c0_i32_0 : i32, i32, i32
  }
  func.func @transform_11(%arg0: i32, %arg1: i32) -> (i32, i32, i32) {
    %c0_i32 = arith.constant 0 : i32
    %c0_i32_0 = arith.constant 0 : i32
    %c0_i32_1 = arith.constant 0 : i32
    return %arg1, %c0_i32, %c0_i32_0 : i32, i32, i32
  }
  func.func @transform_12(%arg0: i32, %arg1: i32) -> (i32, i32, i32) {
    %c0_i32 = arith.constant 0 : i32
    %c0_i32_0 = arith.constant 0 : i32
    %c0_i32_1 = arith.constant 0 : i32
    return %arg1, %c0_i32, %c0_i32_0 : i32, i32, i32
  }
  func.func @transform_13(%arg0: i32, %arg1: i32) -> (i32, i32, i32) {
    %c0_i32 = arith.constant 0 : i32
    %c0_i32_0 = arith.constant 0 : i32
    %c0_i32_1 = arith.constant 0 : i32
    return %arg1, %c0_i32, %c0_i32_0 : i32, i32, i32
  }
  func.func @transform_14(%arg0: i32, %arg1: i32) -> (i32, i32, i32) {
    %c0_i32 = arith.constant 0 : i32
    %c0_i32_0 = arith.constant 0 : i32
    %c0_i32_1 = arith.constant 0 : i32
    return %arg1, %c0_i32, %c0_i32_0 : i32, i32, i32
  }
  func.func @transform_15(%arg0: i32, %arg1: i32) -> (i32, i32, i32) {
    %c0_i32 = arith.constant 0 : i32
    %c0_i32_0 = arith.constant 0 : i32
    %c0_i32_1 = arith.constant 0 : i32
    return %arg1, %c0_i32, %c0_i32_0 : i32, i32, i32
  }
  func.func @transform_16(%arg0: i32, %arg1: i32) -> (i32, i32, i32) {
    %c0_i32 = arith.constant 0 : i32
    %c0_i32_0 = arith.constant 0 : i32
    %c0_i32_1 = arith.constant 0 : i32
    return %arg0, %c0_i32, %c0_i32_0 : i32, i32, i32
  }
}

</mosaic_0001>

<llo_original>
// kernel: tpu_custom_call.1
$region0: #{tpu_custom_call.1}
  #allocation0 [shape = 'u32[]', space=smem, size = 0x4, offset = 0x4, fixed_abs, tag = 'smem constant byte address 0x4 - core index']
  #allocation1 [shape = 'u32[144,128]{1,0:T(1,128)}', space=vmem, size = 0x12000, scoped, tag = 'internal scratch']
  #allocation2 [shape = 'f32[16,32]{1,0:T(8,128)}', space=vmem, size = 0x2000, scoped, tag = 'scratch operand']
  #allocation3 [shape = 'bf16[1,16,96]{2,1,0:T(16,128)(2,1)}', space=vmem, size = 0x1000, scoped, tag = 'scratch operand']
  #allocation4 [shape = 'f32[1,16,32]{2,1,0:T(8,128)}', space=vmem, size = 0x2000, scoped, tag = 'scratch operand']
  %s0 = inlined_call_operand.vmem [shape: bf16[2,16,64], index: 0, kind: input, shape index: {}]
  %s1 = inlined_call_operand.vmem [shape: bf16[64,32], index: 1, kind: input, shape index: {}]
  %s2 = inlined_call_operand.vmem [shape: f32[1,32], index: 2, kind: input, shape index: {}]
  %s3 = inlined_call_operand.hbm [shape: f32[16,32], index: 3, kind: input, shape index: {}]
  %s4 = inlined_call_operand.vmem [shape: bf16[2,32,96], index: 4, kind: input, shape index: {}]
  %s5 = inlined_call_operand.vmem [shape: f32[2,1,96], index: 5, kind: input, shape index: {}]
  %s6 = inlined_call_operand.vmem [shape: bf16[2,32,32], index: 6, kind: input, shape index: {}]
  %s7 = inlined_call_operand.vmem [shape: f32[2,1,32], index: 7, kind: input, shape index: {}]
  %s8 = inlined_call_operand.vmem [shape: f32[2,1,32], index: 8, kind: input, shape index: {}]
  %s9 = inlined_call_operand.vmem [shape: f32[2,1,32], index: 9, kind: input, shape index: {}]
  %s10 = inlined_call_operand.vmem [shape: bf16[2,32,64], index: 10, kind: input, shape index: {}]
  %s11 = inlined_call_operand.vmem [shape: f32[2,1,64], index: 11, kind: input, shape index: {}]
  %s12 = inlined_call_operand.vmem [shape: bf16[2,64,32], index: 12, kind: input, shape index: {}]
  %s13 = inlined_call_operand.vmem [shape: f32[2,1,32], index: 13, kind: input, shape index: {}]
  %s14 = inlined_call_operand.vmem [shape: f32[2,1,32], index: 14, kind: input, shape index: {}]
  %s15 = inlined_call_operand.vmem [shape: f32[2,1,32], index: 15, kind: input, shape index: {}]
  %s16 = inlined_call_operand.hbm [shape: f32[2,16,32], index: 16, kind: output, shape index: {}]
  %s17 = sld [smem:[#allocation0]]
  $region109: #{tpu_custom_call.1} parent=0
    _
  %s19 = ssub.s32 1, %s17
  %s20 = scalar_select 0, %s19, %s17
  $region1: #{tpu_custom_call.1} parent=0
    #allocation5 [shape = 'u8[8192]{0}', space=vmem, size = 0x2000, scoped, tag = 'input window, operand 3, single buffered']
    #allocation6 [shape = 's32[2]{0}', space=sflag, size = 0x8, scoped, tag = 'scoped memory for tpu_custom_call.1']
    #allocation7 [shape = 's32[2]{0}', space=sflag, size = 0x8, scoped, tag = 'scoped memory for tpu_custom_call.1']
    #allocation8 [shape = 'u8[16384]{0}', space=vmem, size = 0x4000, scoped, tag = 'output window, operand 0']
    %21 = vsyncpa [#allocation6], 0
    %22 = vsyncpa [#allocation7], 0
    %s23 = scalar_lea.sflag [#allocation7], 1
    %24 = vsyncpa %s23, 0
    loop: start=0, step=1, limit=6
    $region2: #{tpu_custom_call.1} parent=1 // loop_pre_header
      _
    $region3: #{tpu_custom_call.1} parent=1 // loop_header
      %s26 = sphi 0, %s30
      %p27 = scmp.ge.s32.totalorder %s26, 6
      %s33 = sphi 0, %s45
      %s34 = sphi 0, %s41
      %s35 = sphi 0, %s33
      %s36 = sphi 0, %s34
      %s37 = sphi 0, %s35
      %s38 = sphi 0, %s36
      %s48 = sphi 0, %s50
      %s51 = sphi 0, %s48
      %s52 = sphi 0, %s51
      %s68 = sphi 0, %s52
      %s72 = sphi 0, %s72
      %s74 = sphi 0, %s72
      %s75 = sphi 0, %s74
      %s89 = sphi 0, %s75
      %s93 = sphi 0, %s93
      %s95 = sphi 0, %s93
      %s96 = sphi 0, %s95
      %s110 = sphi 0, %s96
      %s114 = sphi 0, %s114
      %s116 = sphi 0, %s114
      %s117 = sphi 0, %s116
      %s131 = sphi 0, %s117
      %s137 = sphi 0, %s139
      %s140 = sphi 0, %s137
      %s141 = sphi 0, %s140
      %s157 = sphi 0, %s141
      %s163 = sphi 0, %s165
      %s166 = sphi 0, %s163
      %s167 = sphi 0, %s166
      %s183 = sphi 0, %s167
      %s189 = sphi 0, %s191
      %s192 = sphi 0, %s189
      %s193 = sphi 0, %s192
      %s209 = sphi 0, %s193
      %s215 = sphi 0, %s217
      %s218 = sphi 0, %s215
      %s219 = sphi 0, %s218
      %s235 = sphi 0, %s219
      %s241 = sphi 0, %s243
      %s244 = sphi 0, %s241
      %s245 = sphi 0, %s244
      %s261 = sphi 0, %s245
      %s267 = sphi 0, %s269
      %s270 = sphi 0, %s267
      %s271 = sphi 0, %s270
      %s287 = sphi 0, %s271
      %s293 = sphi 0, %s295
      %s296 = sphi 0, %s293
      %s297 = sphi 0, %s296
      %s313 = sphi 0, %s297
      %s319 = sphi 0, %s321
      %s322 = sphi 0, %s319
      %s323 = sphi 0, %s322
      %s339 = sphi 0, %s323
      %s345 = sphi 0, %s347
      %s348 = sphi 0, %s345
      %s349 = sphi 0, %s348
      %s365 = sphi 0, %s349
      %s371 = sphi 0, %s373
      %s374 = sphi 0, %s371
      %s375 = sphi 0, %s374
      %s391 = sphi 0, %s375
      %s397 = sphi 0, %s399
      %s400 = sphi 0, %s397
      %s401 = sphi 0, %s400
      %s417 = sphi 0, %s401
      %s423 = sphi 0, %s425
      %s426 = sphi 0, %s423
      %s427 = sphi 0, %s426
      %s443 = sphi 0, %s427
      %s449 = sphi 0, %s451
      %s452 = sphi 0, %s449
      %s453 = sphi 0, %s452
      %s469 = sphi 0, %s453
    $region4: #{tpu_custom_call.1} parent=1 // loop_header_branch
      %29 = sbr.rel (%p27) target = $region8
    $region5: #{tpu_custom_call.1} parent=1 // loop_body
      %s31 = ssub.s32 %s26, 1
      %s32 = ssub.s32 %s26, 2
      %s39 = sadd.s32 1, %s34
      %p40 = scmp.ge.s32.totalorder %s39, 2
      %s41 = scalar_select %p40, 0, %s39
      %s42 = sadd.s32 1, %s33
      %s43 = scalar_select %p40, %s42, %s33
      %p44 = scmp.ge.s32.totalorder %s43, 2
      %s45 = scalar_select %p44, 0, %s43
      %s46 = ssub.s32 %s33, %s45
      %p47 = scmp.eq.s32.totalorder %s46, 0
      %s49 = sadd.s32 %s48, 1
      %s50 = scalar_select %p47, %s48, %s49
      %p53 = pneg %p47
      %p54 = scmp.eq.s32.totalorder %s26, 3
      %p55 = por %p53, %p54
      %p56 = scmp.ne.s32.totalorder %s48, %s51
      %p57 = scmp.eq.s32.totalorder %s26, 0
      %p58 = por %p56, %p57
      %p59 = scmp.ne.s32.totalorder %s48, %s51
      %p60 = scmp.eq.s32.totalorder %s31, 3
      %p61 = por %p59, %p60
      %p62 = scmp.ne.s32.totalorder %s51, %s52
      %p63 = scmp.eq.s32.totalorder %s31, 0
      %p64 = por %p62, %p63
      %p65 = scmp.ne.s32.totalorder %s51, %s52
      %p66 = scmp.eq.s32.totalorder %s32, 3
      %p67 = por %p65, %p66
      %p69 = scmp.ne.s32.totalorder %s52, %s68
      %p70 = scmp.eq.s32.totalorder %s32, 0
      %p71 = por %p69, %p70
      %s73 = sadd.s32 %s72, 1
      %p76 = scmp.eq.s32.totalorder %s26, 3
      %p77 = scmp.ne.s32.totalorder %s72, %s74
      %p78 = scmp.eq.s32.totalorder %s26, 0
      %p79 = por %p77, %p78
      %p80 = scmp.ne.s32.totalorder %s72, %s74
      %p81 = scmp.eq.s32.totalorder %s31, 3
      %p82 = por %p80, %p81
      %p83 = scmp.ne.s32.totalorder %s74, %s75
      %p84 = scmp.eq.s32.totalorder %s31, 0
      %p85 = por %p83, %p84
      %p86 = scmp.ne.s32.totalorder %s74, %s75
      %p87 = scmp.eq.s32.totalorder %s32, 3
      %p88 = por %p86, %p87
      %p90 = scmp.ne.s32.totalorder %s75, %s89
      %p91 = scmp.eq.s32.totalorder %s32, 0
      %p92 = por %p90, %p91
      %s94 = sadd.s32 %s93, 1
      %p97 = scmp.eq.s32.totalorder %s26, 3
      %p98 = scmp.ne.s32.totalorder %s93, %s95
      %p99 = scmp.eq.s32.totalorder %s26, 0
      %p100 = por %p98, %p99
      %p101 = scmp.ne.s32.totalorder %s93, %s95
      %p102 = scmp.eq.s32.totalorder %s31, 3
      %p103 = por %p101, %p102
      %p104 = scmp.ne.s32.totalorder %s95, %s96
      %p105 = scmp.eq.s32.totalorder %s31, 0
      %p106 = por %p104, %p105
      %p107 = scmp.ne.s32.totalorder %s95, %s96
      %p108 = scmp.eq.s32.totalorder %s32, 3
      %p109 = por %p107, %p108
      %p111 = scmp.ne.s32.totalorder %s96, %s110
      %p112 = scmp.eq.s32.totalorder %s32, 0
      %p113 = por %p111, %p112
      %s115 = sadd.s32 %s114, 1
      %p118 = scmp.eq.s32.totalorder %s26, 3
      %p119 = scmp.ne.s32.totalorder %s114, %s116
      %p120 = scmp.eq.s32.totalorder %s26, 0
      %p121 = por %p119, %p120
      %p122 = scmp.ne.s32.totalorder %s114, %s116
      %p123 = scmp.eq.s32.totalorder %s31, 3
      %p124 = por %p122, %p123
      %p125 = scmp.ne.s32.totalorder %s116, %s117
      %p126 = scmp.eq.s32.totalorder %s31, 0
      %p127 = por %p125, %p126
      %p128 = scmp.ne.s32.totalorder %s116, %s117
      %p129 = scmp.eq.s32.totalorder %s32, 3
      %p130 = por %p128, %p129
      %p132 = scmp.ne.s32.totalorder %s117, %s131
      %p133 = scmp.eq.s32.totalorder %s32, 0
      %p134 = por %p132, %p133
      %s135 = ssub.s32 %s34, %s41
      %p136 = scmp.eq.s32.totalorder %s135, 0
      %s138 = sadd.s32 %s137, 1
      %s139 = scalar_select %p136, %s137, %s138
      %p142 = pneg %p136
      %p143 = scmp.eq.s32.totalorder %s26, 3
      %p144 = por %p142, %p143
      %p145 = scmp.ne.s32.totalorder %s137, %s140
      %p146 = scmp.eq.s32.totalorder %s26, 0
      %p147 = por %p145, %p146
      %p148 = scmp.ne.s32.totalorder %s137, %s140
      %p149 = scmp.eq.s32.totalorder %s31, 3
      %p150 = por %p148, %p149
      %p151 = scmp.ne.s32.totalorder %s140, %s141
      %p152 = scmp.eq.s32.totalorder %s31, 0
      %p153 = por %p151, %p152
      %p154 = scmp.ne.s32.totalorder %s140, %s141
      %p155 = scmp.eq.s32.totalorder %s32, 3
      %p156 = por %p154, %p155
      %p158 = scmp.ne.s32.totalorder %s141, %s157
      %p159 = scmp.eq.s32.totalorder %s32, 0
      %p160 = por %p158, %p159
      %s161 = ssub.s32 %s34, %s41
      %p162 = scmp.eq.s32.totalorder %s161, 0
      %s164 = sadd.s32 %s163, 1
      %s165 = scalar_select %p162, %s163, %s164
      %p168 = pneg %p162
      %p169 = scmp.eq.s32.totalorder %s26, 3
      %p170 = por %p168, %p169
      %p171 = scmp.ne.s32.totalorder %s163, %s166
      %p172 = scmp.eq.s32.totalorder %s26, 0
      %p173 = por %p171, %p172
      %p174 = scmp.ne.s32.totalorder %s163, %s166
      %p175 = scmp.eq.s32.totalorder %s31, 3
      %p176 = por %p174, %p175
      %p177 = scmp.ne.s32.totalorder %s166, %s167
      %p178 = scmp.eq.s32.totalorder %s31, 0
      %p179 = por %p177, %p178
      %p180 = scmp.ne.s32.totalorder %s166, %s167
      %p181 = scmp.eq.s32.totalorder %s32, 3
      %p182 = por %p180, %p181
      %p184 = scmp.ne.s32.totalorder %s167, %s183
      %p185 = scmp.eq.s32.totalorder %s32, 0
      %p186 = por %p184, %p185
      %s187 = ssub.s32 %s34, %s41
      %p188 = scmp.eq.s32.totalorder %s187, 0
      %s190 = sadd.s32 %s189, 1
      %s191 = scalar_select %p188, %s189, %s190
      %p194 = pneg %p188
      %p195 = scmp.eq.s32.totalorder %s26, 3
      %p196 = por %p194, %p195
      %p197 = scmp.ne.s32.totalorder %s189, %s192
      %p198 = scmp.eq.s32.totalorder %s26, 0
      %p199 = por %p197, %p198
      %p200 = scmp.ne.s32.totalorder %s189, %s192
      %p201 = scmp.eq.s32.totalorder %s31, 3
      %p202 = por %p200, %p201
      %p203 = scmp.ne.s32.totalorder %s192, %s193
      %p204 = scmp.eq.s32.totalorder %s31, 0
      %p205 = por %p203, %p204
      %p206 = scmp.ne.s32.totalorder %s192, %s193
      %p207 = scmp.eq.s32.totalorder %s32, 3
      %p208 = por %p206, %p207
      %p210 = scmp.ne.s32.totalorder %s193, %s209
      %p211 = scmp.eq.s32.totalorder %s32, 0
      %p212 = por %p210, %p211
      %s213 = ssub.s32 %s34, %s41
      %p214 = scmp.eq.s32.totalorder %s213, 0
      %s216 = sadd.s32 %s215, 1
      %s217 = scalar_select %p214, %s215, %s216
      %p220 = pneg %p214
      %p221 = scmp.eq.s32.totalorder %s26, 3
      %p222 = por %p220, %p221
      %p223 = scmp.ne.s32.totalorder %s215, %s218
      %p224 = scmp.eq.s32.totalorder %s26, 0
      %p225 = por %p223, %p224
      %p226 = scmp.ne.s32.totalorder %s215, %s218
      %p227 = scmp.eq.s32.totalorder %s31, 3
      %p228 = por %p226, %p227
      %p229 = scmp.ne.s32.totalorder %s218, %s219
      %p230 = scmp.eq.s32.totalorder %s31, 0
      %p231 = por %p229, %p230
      %p232 = scmp.ne.s32.totalorder %s218, %s219
      %p233 = scmp.eq.s32.totalorder %s32, 3
      %p234 = por %p232, %p233
      %p236 = scmp.ne.s32.totalorder %s219, %s235
      %p237 = scmp.eq.s32.totalorder %s32, 0
      %p238 = por %p236, %p237
      %s239 = ssub.s32 %s34, %s41
      %p240 = scmp.eq.s32.totalorder %s239, 0
      %s242 = sadd.s32 %s241, 1
      %s243 = scalar_select %p240, %s241, %s242
      %p246 = pneg %p240
      %p247 = scmp.eq.s32.totalorder %s26, 3
      %p248 = por %p246, %p247
      %p249 = scmp.ne.s32.totalorder %s241, %s244
      %p250 = scmp.eq.s32.totalorder %s26, 0
      %p251 = por %p249, %p250
      %p252 = scmp.ne.s32.totalorder %s241, %s244
      %p253 = scmp.eq.s32.totalorder %s31, 3
      %p254 = por %p252, %p253
      %p255 = scmp.ne.s32.totalorder %s244, %s245
      %p256 = scmp.eq.s32.totalorder %s31, 0
      %p257 = por %p255, %p256
      %p258 = scmp.ne.s32.totalorder %s244, %s245
      %p259 = scmp.eq.s32.totalorder %s32, 3
      %p260 = por %p258, %p259
      %p262 = scmp.ne.s32.totalorder %s245, %s261
      %p263 = scmp.eq.s32.totalorder %s32, 0
      %p264 = por %p262, %p263
      %s265 = ssub.s32 %s34, %s41
      %p266 = scmp.eq.s32.totalorder %s265, 0
      %s268 = sadd.s32 %s267, 1
      %s269 = scalar_select %p266, %s267, %s268
      %p272 = pneg %p266
      %p273 = scmp.eq.s32.totalorder %s26, 3
      %p274 = por %p272, %p273
      %p275 = scmp.ne.s32.totalorder %s267, %s270
      %p276 = scmp.eq.s32.totalorder %s26, 0
      %p277 = por %p275, %p276
      %p278 = scmp.ne.s32.totalorder %s267, %s270
      %p279 = scmp.eq.s32.totalorder %s31, 3
      %p280 = por %p278, %p279
      %p281 = scmp.ne.s32.totalorder %s270, %s271
      %p282 = scmp.eq.s32.totalorder %s31, 0
      %p283 = por %p281, %p282
      %p284 = scmp.ne.s32.totalorder %s270, %s271
      %p285 = scmp.eq.s32.totalorder %s32, 3
      %p286 = por %p284, %p285
      %p288 = scmp.ne.s32.totalorder %s271, %s287
      %p289 = scmp.eq.s32.totalorder %s32, 0
      %p290 = por %p288, %p289
      %s291 = ssub.s32 %s34, %s41
      %p292 = scmp.eq.s32.totalorder %s291, 0
      %s294 = sadd.s32 %s293, 1
      %s295 = scalar_select %p292, %s293, %s294
      %p298 = pneg %p292
      %p299 = scmp.eq.s32.totalorder %s26, 3
      %p300 = por %p298, %p299
      %p301 = scmp.ne.s32.totalorder %s293, %s296
      %p302 = scmp.eq.s32.totalorder %s26, 0
      %p303 = por %p301, %p302
      %p304 = scmp.ne.s32.totalorder %s293, %s296
      %p305 = scmp.eq.s32.totalorder %s31, 3
      %p306 = por %p304, %p305
      %p307 = scmp.ne.s32.totalorder %s296, %s297
      %p308 = scmp.eq.s32.totalorder %s31, 0
      %p309 = por %p307, %p308
      %p310 = scmp.ne.s32.totalorder %s296, %s297
      %p311 = scmp.eq.s32.totalorder %s32, 3
      %p312 = por %p310, %p311
      %p314 = scmp.ne.s32.totalorder %s297, %s313
      %p315 = scmp.eq.s32.totalorder %s32, 0
      %p316 = por %p314, %p315
      %s317 = ssub.s32 %s34, %s41
      %p318 = scmp.eq.s32.totalorder %s317, 0
      %s320 = sadd.s32 %s319, 1
      %s321 = scalar_select %p318, %s319, %s320
      %p324 = pneg %p318
      %p325 = scmp.eq.s32.totalorder %s26, 3
      %p326 = por %p324, %p325
      %p327 = scmp.ne.s32.totalorder %s319, %s322
      %p328 = scmp.eq.s32.totalorder %s26, 0
      %p329 = por %p327, %p328
      %p330 = scmp.ne.s32.totalorder %s319, %s322
      %p331 = scmp.eq.s32.totalorder %s31, 3
      %p332 = por %p330, %p331
      %p333 = scmp.ne.s32.totalorder %s322, %s323
      %p334 = scmp.eq.s32.totalorder %s31, 0
      %p335 = por %p333, %p334
      %p336 = scmp.ne.s32.totalorder %s322, %s323
      %p337 = scmp.eq.s32.totalorder %s32, 3
      %p338 = por %p336, %p337
      %p340 = scmp.ne.s32.totalorder %s323, %s339
      %p341 = scmp.eq.s32.totalorder %s32, 0
      %p342 = por %p340, %p341
      %s343 = ssub.s32 %s34, %s41
      %p344 = scmp.eq.s32.totalorder %s343, 0
      %s346 = sadd.s32 %s345, 1
      %s347 = scalar_select %p344, %s345, %s346
      %p350 = pneg %p344
      %p351 = scmp.eq.s32.totalorder %s26, 3
      %p352 = por %p350, %p351
      %p353 = scmp.ne.s32.totalorder %s345, %s348
      %p354 = scmp.eq.s32.totalorder %s26, 0
      %p355 = por %p353, %p354
      %p356 = scmp.ne.s32.totalorder %s345, %s348
      %p357 = scmp.eq.s32.totalorder %s31, 3
      %p358 = por %p356, %p357
      %p359 = scmp.ne.s32.totalorder %s348, %s349
      %p360 = scmp.eq.s32.totalorder %s31, 0
      %p361 = por %p359, %p360
      %p362 = scmp.ne.s32.totalorder %s348, %s349
      %p363 = scmp.eq.s32.totalorder %s32, 3
      %p364 = por %p362, %p363
      %p366 = scmp.ne.s32.totalorder %s349, %s365
      %p367 = scmp.eq.s32.totalorder %s32, 0
      %p368 = por %p366, %p367
      %s369 = ssub.s32 %s34, %s41
      %p370 = scmp.eq.s32.totalorder %s369, 0
      %s372 = sadd.s32 %s371, 1
      %s373 = scalar_select %p370, %s371, %s372
      %p376 = pneg %p370
      %p377 = scmp.eq.s32.totalorder %s26, 3
      %p378 = por %p376, %p377
      %p379 = scmp.ne.s32.totalorder %s371, %s374
      %p380 = scmp.eq.s32.totalorder %s26, 0
      %p381 = por %p379, %p380
      %p382 = scmp.ne.s32.totalorder %s371, %s374
      %p383 = scmp.eq.s32.totalorder %s31, 3
      %p384 = por %p382, %p383
      %p385 = scmp.ne.s32.totalorder %s374, %s375
      %p386 = scmp.eq.s32.totalorder %s31, 0
      %p387 = por %p385, %p386
      %p388 = scmp.ne.s32.totalorder %s374, %s375
      %p389 = scmp.eq.s32.totalorder %s32, 3
      %p390 = por %p388, %p389
      %p392 = scmp.ne.s32.totalorder %s375, %s391
      %p393 = scmp.eq.s32.totalorder %s32, 0
      %p394 = por %p392, %p393
      %s395 = ssub.s32 %s34, %s41
      %p396 = scmp.eq.s32.totalorder %s395, 0
      %s398 = sadd.s32 %s397, 1
      %s399 = scalar_select %p396, %s397, %s398
      %p402 = pneg %p396
      %p403 = scmp.eq.s32.totalorder %s26, 3
      %p404 = por %p402, %p403
      %p405 = scmp.ne.s32.totalorder %s397, %s400
      %p406 = scmp.eq.s32.totalorder %s26, 0
      %p407 = por %p405, %p406
      %p408 = scmp.ne.s32.totalorder %s397, %s400
      %p409 = scmp.eq.s32.totalorder %s31, 3
      %p410 = por %p408, %p409
      %p411 = scmp.ne.s32.totalorder %s400, %s401
      %p412 = scmp.eq.s32.totalorder %s31, 0
      %p413 = por %p411, %p412
      %p414 = scmp.ne.s32.totalorder %s400, %s401
      %p415 = scmp.eq.s32.totalorder %s32, 3
      %p416 = por %p414, %p415
      %p418 = scmp.ne.s32.totalorder %s401, %s417
      %p419 = scmp.eq.s32.totalorder %s32, 0
      %p420 = por %p418, %p419
      %s421 = ssub.s32 %s34, %s41
      %p422 = scmp.eq.s32.totalorder %s421, 0
      %s424 = sadd.s32 %s423, 1
      %s425 = scalar_select %p422, %s423, %s424
      %p428 = pneg %p422
      %p429 = scmp.eq.s32.totalorder %s26, 3
      %p430 = por %p428, %p429
      %p431 = scmp.ne.s32.totalorder %s423, %s426
      %p432 = scmp.eq.s32.totalorder %s26, 0
      %p433 = por %p431, %p432
      %p434 = scmp.ne.s32.totalorder %s423, %s426
      %p435 = scmp.eq.s32.totalorder %s31, 3
      %p436 = por %p434, %p435
      %p437 = scmp.ne.s32.totalorder %s426, %s427
      %p438 = scmp.eq.s32.totalorder %s31, 0
      %p439 = por %p437, %p438
      %p440 = scmp.ne.s32.totalorder %s426, %s427
      %p441 = scmp.eq.s32.totalorder %s32, 3
      %p442 = por %p440, %p441
      %p444 = scmp.ne.s32.totalorder %s427, %s443
      %p445 = scmp.eq.s32.totalorder %s32, 0
      %p446 = por %p444, %p445
      %s447 = ssub.s32 %s33, %s45
      %p448 = scmp.eq.s32.totalorder %s447, 0
      %s450 = sadd.s32 %s449, 1
      %s451 = scalar_select %p448, %s449, %s450
      %p454 = pneg %p448
      %p455 = scmp.eq.s32.totalorder %s26, 3
      %p456 = por %p454, %p455
      %p457 = scmp.ne.s32.totalorder %s449, %s452
      %p458 = scmp.eq.s32.totalorder %s26, 0
      %p459 = por %p457, %p458
      %p460 = scmp.ne.s32.totalorder %s449, %s452
      %p461 = scmp.eq.s32.totalorder %s31, 3
      %p462 = por %p460, %p461
      %p463 = scmp.ne.s32.totalorder %s452, %s453
      %p464 = scmp.eq.s32.totalorder %s31, 0
      %p465 = por %p463, %p464
      %p466 = scmp.ne.s32.totalorder %s452, %s453
      %p467 = scmp.eq.s32.totalorder %s32, 3
      %p468 = por %p466, %p467
      %p470 = scmp.ne.s32.totalorder %s453, %s469
      %p471 = scmp.eq.s32.totalorder %s32, 0
      %p472 = por %p470, %p471
      %p473 = scmp.le.s32.totalorder 1, %s26
      %p474 = scmp.lt.s32.totalorder %s26, 5
      %p475 = pnand %p473, %p474
      %p476 = pneg %p475
      // Predicated region
      $region9: #{tpu_custom_call.1} parent=5 // pred_check
        _
      $region10: #{tpu_custom_call.1} parent=5 // pred_check_branch
        %478 = sbr.rel (%p475) target = $region12
      $region11: #{tpu_custom_call.1} parent=5 // pred_region
        %s479 = ssub.s32 %s26, 1
        // Predicated region
        $region13: #{tpu_custom_call.1} parent=11 // pred_check
          %p480 = pneg %p85
        $region14: #{tpu_custom_call.1} parent=11 // pred_check_branch
          %482 = sbr.rel (%p480) target = $region16
        $region15: #{tpu_custom_call.1} parent=11 // pred_region
          _
        $region16: #{tpu_custom_call.1} parent=11 // pred_fallthru
          _
        // Predicated region
        $region17: #{tpu_custom_call.1} parent=11 // pred_check
          %p483 = pneg %p106
        $region18: #{tpu_custom_call.1} parent=11 // pred_check_branch
          %485 = sbr.rel (%p483) target = $region20
        $region19: #{tpu_custom_call.1} parent=11 // pred_region
          _
        $region20: #{tpu_custom_call.1} parent=11 // pred_fallthru
          _
        // Predicated region
        $region21: #{tpu_custom_call.1} parent=11 // pred_check
          %p486 = pneg %p127
        $region22: #{tpu_custom_call.1} parent=11 // pred_check_branch
          %488 = sbr.rel (%p486) target = $region24
        $region23: #{tpu_custom_call.1} parent=11 // pred_region
          %s490 = ssub.s32 256, 256
          %491 = vsyncadd [#allocation6], %s490
          %s492 = sshll.u32 [#allocation5], 4
          %s493 = int_to_ptr.vmem [resolvable:$true] %s492
          %498 = dma.hbm_to_vmem [thread:$0]  %s3, 256, %s493, [#allocation6], 128, 128, 8
        $region24: #{tpu_custom_call.1} parent=11 // pred_fallthru
          _
      $region12: #{tpu_custom_call.1} parent=5 // pred_fallthru
        _
      %p499 = scmp.lt.s32.totalorder %s26, 4
      // Predicated region
      $region25: #{tpu_custom_call.1} parent=5 // pred_check
        %p500 = pneg %p499
      $region26: #{tpu_custom_call.1} parent=5 // pred_check_branch
        %502 = sbr.rel (%p500) target = $region28
      $region27: #{tpu_custom_call.1} parent=5 // pred_region
        // Predicated region
        $region29: #{tpu_custom_call.1} parent=27 // pred_check
          %p503 = pneg %p58
        $region30: #{tpu_custom_call.1} parent=27 // pred_check_branch
          %505 = sbr.rel (%p503) target = $region32
        $region31: #{tpu_custom_call.1} parent=27 // pred_region
          %p506 = scmp.lt.s32.totalorder %s33, 1
          %s507 = scalar_select %p506, %s33, 1
          %s508 = smul.addr %s507, 2
          %s509 = smul.addr %s508, 4
          %s510 = scalar_lea.vmem %s0, %s509
        $region32: #{tpu_custom_call.1} parent=27 // pred_fallthru
          _
        // Predicated region
        $region33: #{tpu_custom_call.1} parent=27 // pred_check
          %p511 = pneg %p147
        $region34: #{tpu_custom_call.1} parent=27 // pred_check_branch
          %513 = sbr.rel (%p511) target = $region36
        $region35: #{tpu_custom_call.1} parent=27 // pred_region
          %p514 = scmp.lt.s32.totalorder %s34, 1
          %s515 = scalar_select %p514, %s34, 1
          %s516 = smul.addr %s515, 4
          %s517 = smul.addr %s516, 4
          %s518 = scalar_lea.vmem %s4, %s517
        $region36: #{tpu_custom_call.1} parent=27 // pred_fallthru
          _
        // Predicated region
        $region37: #{tpu_custom_call.1} parent=27 // pred_check
          %p519 = pneg %p173
        $region38: #{tpu_custom_call.1} parent=27 // pred_check_branch
          %521 = sbr.rel (%p519) target = $region40
        $region39: #{tpu_custom_call.1} parent=27 // pred_region
          %p522 = scmp.lt.s32.totalorder %s34, 1
          %s523 = scalar_select %p522, %s34, 1
          %s524 = scalar_lea.vmem %s5, %s523
        $region40: #{tpu_custom_call.1} parent=27 // pred_fallthru
          _
        // Predicated region
        $region41: #{tpu_custom_call.1} parent=27 // pred_check
          %p525 = pneg %p199
        $region42: #{tpu_custom_call.1} parent=27 // pred_check_branch
          %527 = sbr.rel (%p525) target = $region44
        $region43: #{tpu_custom_call.1} parent=27 // pred_region
          %p528 = scmp.lt.s32.totalorder %s34, 1
          %s529 = scalar_select %p528, %s34, 1
          %s530 = smul.addr %s529, 4
          %s531 = smul.addr %s530, 4
          %s532 = scalar_lea.vmem %s6, %s531
        $region44: #{tpu_custom_call.1} parent=27 // pred_fallthru
          _
        // Predicated region
        $region45: #{tpu_custom_call.1} parent=27 // pred_check
          %p533 = pneg %p225
        $region46: #{tpu_custom_call.1} parent=27 // pred_check_branch
          %535 = sbr.rel (%p533) target = $region48
        $region47: #{tpu_custom_call.1} parent=27 // pred_region
          %p536 = scmp.lt.s32.totalorder %s34, 1
          %s537 = scalar_select %p536, %s34, 1
          %s538 = scalar_lea.vmem %s7, %s537
        $region48: #{tpu_custom_call.1} parent=27 // pred_fallthru
          _
        // Predicated region
        $region49: #{tpu_custom_call.1} parent=27 // pred_check
          %p539 = pneg %p251
        $region50: #{tpu_custom_call.1} parent=27 // pred_check_branch
          %541 = sbr.rel (%p539) target = $region52
        $region51: #{tpu_custom_call.1} parent=27 // pred_region
          %p542 = scmp.lt.s32.totalorder %s34, 1
          %s543 = scalar_select %p542, %s34, 1
          %s544 = scalar_lea.vmem %s8, %s543
        $region52: #{tpu_custom_call.1} parent=27 // pred_fallthru
          _
        // Predicated region
        $region53: #{tpu_custom_call.1} parent=27 // pred_check
          %p545 = pneg %p277
        $region54: #{tpu_custom_call.1} parent=27 // pred_check_branch
          %547 = sbr.rel (%p545) target = $region56
        $region55: #{tpu_custom_call.1} parent=27 // pred_region
          %p548 = scmp.lt.s32.totalorder %s34, 1
          %s549 = scalar_select %p548, %s34, 1
          %s550 = scalar_lea.vmem %s9, %s549
        $region56: #{tpu_custom_call.1} parent=27 // pred_fallthru
          _
        // Predicated region
        $region57: #{tpu_custom_call.1} parent=27 // pred_check
          %p551 = pneg %p303
        $region58: #{tpu_custom_call.1} parent=27 // pred_check_branch
          %553 = sbr.rel (%p551) target = $region60
        $region59: #{tpu_custom_call.1} parent=27 // pred_region
          %p554 = scmp.lt.s32.totalorder %s34, 1
          %s555 = scalar_select %p554, %s34, 1
          %s556 = smul.addr %s555, 4
          %s557 = smul.addr %s556, 4
          %s558 = scalar_lea.vmem %s10, %s557
        $region60: #{tpu_custom_call.1} parent=27 // pred_fallthru
          _
        // Predicated region
        $region61: #{tpu_custom_call.1} parent=27 // pred_check
          %p559 = pneg %p329
        $region62: #{tpu_custom_call.1} parent=27 // pred_check_branch
          %561 = sbr.rel (%p559) target = $region64
        $region63: #{tpu_custom_call.1} parent=27 // pred_region
          %p562 = scmp.lt.s32.totalorder %s34, 1
          %s563 = scalar_select %p562, %s34, 1
          %s564 = scalar_lea.vmem %s11, %s563
        $region64: #{tpu_custom_call.1} parent=27 // pred_fallthru
          _
        // Predicated region
        $region65: #{tpu_custom_call.1} parent=27 // pred_check
          %p565 = pneg %p355
        $region66: #{tpu_custom_call.1} parent=27 // pred_check_branch
          %567 = sbr.rel (%p565) target = $region68
        $region67: #{tpu_custom_call.1} parent=27 // pred_region
          %p568 = scmp.lt.s32.totalorder %s34, 1
          %s569 = scalar_select %p568, %s34, 1
          %s570 = smul.addr %s569, 8
          %s571 = smul.addr %s570, 4
          %s572 = scalar_lea.vmem %s12, %s571
        $region68: #{tpu_custom_call.1} parent=27 // pred_fallthru
          _
        // Predicated region
        $region69: #{tpu_custom_call.1} parent=27 // pred_check
          %p573 = pneg %p381
        $region70: #{tpu_custom_call.1} parent=27 // pred_check_branch
          %575 = sbr.rel (%p573) target = $region72
        $region71: #{tpu_custom_call.1} parent=27 // pred_region
          %p576 = scmp.lt.s32.totalorder %s34, 1
          %s577 = scalar_select %p576, %s34, 1
          %s578 = scalar_lea.vmem %s13, %s577
        $region72: #{tpu_custom_call.1} parent=27 // pred_fallthru
          _
        // Predicated region
        $region73: #{tpu_custom_call.1} parent=27 // pred_check
          %p579 = pneg %p407
        $region74: #{tpu_custom_call.1} parent=27 // pred_check_branch
          %581 = sbr.rel (%p579) target = $region76
        $region75: #{tpu_custom_call.1} parent=27 // pred_region
          %p582 = scmp.lt.s32.totalorder %s34, 1
          %s583 = scalar_select %p582, %s34, 1
          %s584 = scalar_lea.vmem %s14, %s583
        $region76: #{tpu_custom_call.1} parent=27 // pred_fallthru
          _
        // Predicated region
        $region77: #{tpu_custom_call.1} parent=27 // pred_check
          %p585 = pneg %p433
        $region78: #{tpu_custom_call.1} parent=27 // pred_check_branch
          %587 = sbr.rel (%p585) target = $region80
        $region79: #{tpu_custom_call.1} parent=27 // pred_region
          %p588 = scmp.lt.s32.totalorder %s34, 1
          %s589 = scalar_select %p588, %s34, 1
          %s590 = scalar_lea.vmem %s15, %s589
        $region80: #{tpu_custom_call.1} parent=27 // pred_fallthru
          _
      $region28: #{tpu_custom_call.1} parent=5 // pred_fallthru
        _
      %p591 = scmp.le.s32.totalorder 1, %s26
      %p592 = scmp.lt.s32.totalorder %s26, 5
      %p593 = pnand %p591, %p592
      %p594 = pneg %p593
      // Predicated region
      $region81: #{tpu_custom_call.1} parent=5 // pred_check
        _
      $region82: #{tpu_custom_call.1} parent=5 // pred_check_branch
        %596 = sbr.rel (%p593) target = $region84
      $region83: #{tpu_custom_call.1} parent=5 // pred_region
        %s597 = ssub.s32 %s26, 1
        // Predicated region
        $region85: #{tpu_custom_call.1} parent=83 // pred_check
          %p598 = pneg %p127
        $region86: #{tpu_custom_call.1} parent=83 // pred_check_branch
          %600 = sbr.rel (%p598) target = $region88
        $region87: #{tpu_custom_call.1} parent=83 // pred_region
          %601 = dma.done [#allocation6], 256
        $region88: #{tpu_custom_call.1} parent=83 // pred_fallthru
          _
        %p602 = scmp.lt.s32.totalorder %s35, 1
        %s603 = scalar_select %p602, %s35, 1
        %s604 = smul.addr %s603, 2
        %s605 = smul.addr %s604, 4
        %s606 = scalar_lea.vmem %s0, %s605
        %p607 = pneg %p64
        %p608 = pneg %p61
        %p609 = pneg %p85
        %p610 = pneg %p82
        %p611 = pneg %p106
        %p612 = pneg %p103
        %p613 = pneg %p127
        %p614 = pneg %p124
        %p615 = scmp.lt.s32.totalorder %s36, 1
        %s616 = scalar_select %p615, %s36, 1
        %s617 = smul.addr %s616, 4
        %s618 = smul.addr %s617, 4
        %s619 = scalar_lea.vmem %s4, %s618
        %p620 = pneg %p153
        %p621 = pneg %p150
        %p622 = scmp.lt.s32.totalorder %s36, 1
        %s623 = scalar_select %p622, %s36, 1
        %s624 = scalar_lea.vmem %s5, %s623
        %p625 = pneg %p179
        %p626 = pneg %p176
        %p627 = scmp.lt.s32.totalorder %s36, 1
        %s628 = scalar_select %p627, %s36, 1
        %s629 = smul.addr %s628, 4
        %s630 = smul.addr %s629, 4
        %s631 = scalar_lea.vmem %s6, %s630
        %p632 = pneg %p205
        %p633 = pneg %p202
        %p634 = scmp.lt.s32.totalorder %s36, 1
        %s635 = scalar_select %p634, %s36, 1
        %s636 = scalar_lea.vmem %s7, %s635
        %p637 = pneg %p231
        %p638 = pneg %p228
        %p639 = scmp.lt.s32.totalorder %s36, 1
        %s640 = scalar_select %p639, %s36, 1
        %s641 = scalar_lea.vmem %s8, %s640
        %p642 = pneg %p257
        %p643 = pneg %p254
        %p644 = scmp.lt.s32.totalorder %s36, 1
        %s645 = scalar_select %p644, %s36, 1
        %s646 = scalar_lea.vmem %s9, %s645
        %p647 = pneg %p283
        %p648 = pneg %p280
        %p649 = scmp.lt.s32.totalorder %s36, 1
        %s650 = scalar_select %p649, %s36, 1
        %s651 = smul.addr %s650, 4
        %s652 = smul.addr %s651, 4
        %s653 = scalar_lea.vmem %s10, %s652
        %p654 = pneg %p309
        %p655 = pneg %p306
        %p656 = scmp.lt.s32.totalorder %s36, 1
        %s657 = scalar_select %p656, %s36, 1
        %s658 = scalar_lea.vmem %s11, %s657
        %p659 = pneg %p335
        %p660 = pneg %p332
        %p661 = scmp.lt.s32.totalorder %s36, 1
        %s662 = scalar_select %p661, %s36, 1
        %s663 = smul.addr %s662, 8
        %s664 = smul.addr %s663, 4
        %s665 = scalar_lea.vmem %s12, %s664
        %p666 = pneg %p361
        %p667 = pneg %p358
        %p668 = scmp.lt.s32.totalorder %s36, 1
        %s669 = scalar_select %p668, %s36, 1
        %s670 = scalar_lea.vmem %s13, %s669
        %p671 = pneg %p387
        %p672 = pneg %p384
        %p673 = scmp.lt.s32.totalorder %s36, 1
        %s674 = scalar_select %p673, %s36, 1
        %s675 = scalar_lea.vmem %s14, %s674
        %p676 = pneg %p413
        %p677 = pneg %p410
        %p678 = scmp.lt.s32.totalorder %s36, 1
        %s679 = scalar_select %p678, %s36, 1
        %s680 = scalar_lea.vmem %s15, %s679
        %p681 = pneg %p439
        %p682 = pneg %p436
        %p683 = pneg %p465
        %p684 = pneg %p462
        %s685 = sand.u32 %s452, 1
        %s686 = scalar_lea.sflag [#allocation7], %s685
        %s687 = sand.u32 %s452, 1
        %s688 = smul.addr %s687, 16
        %s689 = scalar_lea.vmem [#allocation8], %s688
        %p690 = scmp.lt.s32.totalorder %s35, 1
        %s691 = scalar_select %p690, %s35, 1
        %s692 = smul.addr %s691, 2
        %s693 = smul.addr %s692, 4
        %s694 = scalar_lea.vmem %s0, %s693
        %p695 = scmp.lt.s32.totalorder %s36, 1
        %s696 = scalar_select %p695, %s36, 1
        %s697 = smul.addr %s696, 4
        %s698 = smul.addr %s697, 4
        %s699 = scalar_lea.vmem %s4, %s698
        %p700 = scmp.lt.s32.totalorder %s36, 1
        %s701 = scalar_select %p700, %s36, 1
        %s702 = scalar_lea.vmem %s5, %s701
        %p703 = scmp.lt.s32.totalorder %s36, 1
        %s704 = scalar_select %p703, %s36, 1
        %s705 = smul.addr %s704, 4
        %s706 = smul.addr %s705, 4
        %s707 = scalar_lea.vmem %s6, %s706
        %p708 = scmp.lt.s32.totalorder %s36, 1
        %s709 = scalar_select %p708, %s36, 1
        %s710 = scalar_lea.vmem %s7, %s709
        %p711 = scmp.lt.s32.totalorder %s36, 1
        %s712 = scalar_select %p711, %s36, 1
        %s713 = scalar_lea.vmem %s8, %s712
        %p714 = scmp.lt.s32.totalorder %s36, 1
        %s715 = scalar_select %p714, %s36, 1
        %s716 = scalar_lea.vmem %s9, %s715
        %p717 = scmp.lt.s32.totalorder %s36, 1
        %s718 = scalar_select %p717, %s36, 1
        %s719 = smul.addr %s718, 4
        %s720 = smul.addr %s719, 4
        %s721 = scalar_lea.vmem %s10, %s720
        %p722 = scmp.lt.s32.totalorder %s36, 1
        %s723 = scalar_select %p722, %s36, 1
        %s724 = scalar_lea.vmem %s11, %s723
        %p725 = scmp.lt.s32.totalorder %s36, 1
        %s726 = scalar_select %p725, %s36, 1
        %s727 = smul.addr %s726, 8
        %s728 = smul.addr %s727, 4
        %s729 = scalar_lea.vmem %s12, %s728
        %p730 = scmp.lt.s32.totalorder %s36, 1
        %s731 = scalar_select %p730, %s36, 1
        %s732 = scalar_lea.vmem %s13, %s731
        %p733 = scmp.lt.s32.totalorder %s36, 1
        %s734 = scalar_select %p733, %s36, 1
        %s735 = scalar_lea.vmem %s14, %s734
        %p736 = scmp.lt.s32.totalorder %s36, 1
        %s737 = scalar_select %p736, %s36, 1
        %s738 = scalar_lea.vmem %s15, %s737
        %p740 = scmp.eq.s32.totalorder %s36, 0
        // Predicated region
        $region89: #{tpu_custom_call.1} parent=83 // pred_check
          %p741 = pneg %p740
        $region90: #{tpu_custom_call.1} parent=83 // pred_check_branch
          %743 = sbr.rel (%p741) target = $region92
        $region91: #{tpu_custom_call.1} parent=83 // pred_region
          %v744 = vld [vmem:[%s694] sm:$0xf]
          %v745 = vld [vmem:[%s694 + $0x4] sm:$0xf]
          %v746 = vld [vmem:[%s1] sm:$0xf]
          %v747 = vld [vmem:[%s1 + $0x4] sm:$0xf]
          %v748 = vld [vmem:[%s1 + $0x8] sm:$0xf]
          %v749 = vld [vmem:[%s1 + $0xc] sm:$0xf]
          %v750 = vld [vmem:[%s1 + $0x10] sm:$0xf]
          %v751 = vld [vmem:[%s1 + $0x14] sm:$0xf]
          %v752 = vld [vmem:[%s1 + $0x18] sm:$0xf]
          %v753 = vld [vmem:[%s1 + $0x1c] sm:$0xf]
          %v756 = vunpack.c.l.b16 %v744
          %v757 = vunpack.c.l.b16 %v745
          %v758 = vpack.c.b16 %v757, %v756
          %v767 = vunpack.c.l.b16 %v746
          %v768 = vunpack.c.l.b16 %v747
          %v769 = vunpack.c.l.b16 %v748
          %v770 = vunpack.c.l.b16 %v749
          %v771 = vunpack.c.l.b16 %v750
          %v772 = vunpack.c.l.b16 %v751
          %v773 = vunpack.c.l.b16 %v752
          %v774 = vunpack.c.l.b16 %v753
          %v775 = vpack.c.b16 %v768, %v767
          %v776 = vpack.c.b16 %v770, %v769
          %v777 = vpack.c.b16 %v772, %v771
          %v778 = vpack.c.b16 %v774, %v773
          %vm783 = vcmask 523264
          %v785 = vsel %vm783, %v758, 0
          %787 = vmatprep.subr.bf16.mxu0 0
          %788 = vmatpush1.bf16.msra.mxu0 %v775
          %789 = vmatprep.subr.bf16.mxu0 0
          %790 = vmatpush1.bf16.msra.mxu0 %v776
          %791 = vmatprep.subr.bf16.mxu0 0
          %792 = vmatpush1.bf16.msra.mxu0 %v777
          %793 = vmatprep.subr.bf16.mxu0 0
          %794 = vmatpush1.bf16.msra.mxu0 %v778
          %795 = vmatprep.subr.bf16.mxu0 0
          %796 = vmatpush1.bf16.msra.mxu0 0
          %797 = vmatprep.subr.bf16.mxu0 0
          %798 = vmatpush1.bf16.msra.mxu0 0
          %799 = vmatprep.subr.bf16.mxu0 0
          %800 = vmatpush1.bf16.msra.mxu0 0
          %801 = vmatprep.subr.bf16.mxu0 0
          %802 = vmatpush1.bf16.msra.mxu0 0
          %803 = vmatprep.subr.bf16.mxu0 0
          %804 = vmatpush1.bf16.msra.mxu0 0
          %805 = vmatprep.subr.bf16.mxu0 0
          %806 = vmatpush1.bf16.msra.mxu0 0
          %807 = vmatprep.subr.bf16.mxu0 0
          %808 = vmatpush1.bf16.msra.mxu0 0
          %809 = vmatprep.subr.bf16.mxu0 0
          %810 = vmatpush1.bf16.msra.mxu0 0
          %811 = vmatprep.subr.bf16.mxu0 0
          %812 = vmatpush1.bf16.msra.mxu0 0
          %813 = vmatprep.subr.bf16.mxu0 0
          %814 = vmatpush1.bf16.msra.mxu0 0
          %815 = vmatprep.subr.bf16.mxu0 0
          %816 = vmatpush1.bf16.msra.mxu0 0
          %817 = vmatprep.subr.bf16.mxu0 0
          %818 = vmatpush1.bf16.msra.mxu0 0
          %819 = vmatprep.mubr.bf16.mxu0 0
          %820 = vmatmul.mubr.bf16.gmra.mrb[0].mxu0 %v785
          %v821 = vpop.f32.mrb[0].mxu0
          %v822 = vadd.f32 0.0, %v821
          %v823 = vpop.f32.mrb[0].mxu0
          %v824 = vpop.f32.mrb[0].mxu0
          %v825 = vadd.f32 0.0, %v824
          %v826 = vpop.f32.mrb[0].mxu0
          %827 = vdwg.mxu0
          %v828 = vld [vmem:[%s2] sm:$0x1]
          %v830 = vlaneseq
          %v831 = vshrl.u32 %v830, 7
          %v832 = vsub.s32 0, %v831
          %v833 = vrot.slane %v828, %v832
          %v835 = vadd.f32 %v822, %v833
          %v836 = vadd.f32 %v825, %v833
          %v837 = vld [vmem:[#allocation5] sm:$0xff]
          %v838 = vld [vmem:[#allocation5 + $0x8] sm:$0xff]
          %v839 = vadd.f32 %v835, %v837
          %v840 = vadd.f32 %v836, %v838
          %vm841 = vcmask 261120
          %842 = vst.msk [vmem:[#allocation2] sm:$0xff] %vm841, %v839
          %843 = vst.msk [vmem:[#allocation2 + $0x8] sm:$0xff] %vm841, %v840
        $region92: #{tpu_custom_call.1} parent=83 // pred_fallthru
          _
        %v844 = vld [vmem:[#allocation2] sm:$0xff]
        %v845 = vld [vmem:[#allocation2 + $0x8] sm:$0xff]
        %v846 = vpack.c.bf16 %v845, %v844
        %v847 = vld [vmem:[%s699] sm:$0xf]
        %v848 = vld [vmem:[%s699 + $0x4] sm:$0xf]
        %v849 = vld [vmem:[%s699 + $0x8] sm:$0xf]
        %v850 = vld [vmem:[%s699 + $0xc] sm:$0xf]
        %v851 = vld [vmem:[%s702] sm:$0x1]
        %v853 = vlaneseq
        %v854 = vshrl.u32 %v853, 7
        %v855 = vsub.s32 0, %v854
        %v856 = vrot.slane %v851, %v855
        %v862 = vunpack.c.l.b16 %v847
        %v863 = vunpack.c.l.b16 %v848
        %v864 = vunpack.c.l.b16 %v849
        %v865 = vunpack.c.l.b16 %v850
        %v866 = vpack.c.b16 %v863, %v862
        %v867 = vpack.c.b16 %v865, %v864
        %vm870 = vcmask 261120
        %v872 = vsel %vm870, %v846, 0
        %874 = vmatprep.subr.bf16.mxu0 0
        %875 = vmatpush1.bf16.msra.mxu0 %v866
        %876 = vmatprep.subr.bf16.mxu0 0
        %877 = vmatpush1.bf16.msra.mxu0 %v867
        %878 = vmatprep.subr.bf16.mxu0 0
        %879 = vmatpush1.bf16.msra.mxu0 0
        %880 = vmatprep.subr.bf16.mxu0 0
        %881 = vmatpush1.bf16.msra.mxu0 0
        %882 = vmatprep.subr.bf16.mxu0 0
        %883 = vmatpush1.bf16.msra.mxu0 0
        %884 = vmatprep.subr.bf16.mxu0 0
        %885 = vmatpush1.bf16.msra.mxu0 0
        %886 = vmatprep.subr.bf16.mxu0 0
        %887 = vmatpush1.bf16.msra.mxu0 0
        %888 = vmatprep.subr.bf16.mxu0 0
        %889 = vmatpush1.bf16.msra.mxu0 0
        %890 = vmatprep.subr.bf16.mxu0 0
        %891 = vmatpush1.bf16.msra.mxu0 0
        %892 = vmatprep.subr.bf16.mxu0 0
        %893 = vmatpush1.bf16.msra.mxu0 0
        %894 = vmatprep.subr.bf16.mxu0 0
        %895 = vmatpush1.bf16.msra.mxu0 0
        %896 = vmatprep.subr.bf16.mxu0 0
        %897 = vmatpush1.bf16.msra.mxu0 0
        %898 = vmatprep.subr.bf16.mxu0 0
        %899 = vmatpush1.bf16.msra.mxu0 0
        %900 = vmatprep.subr.bf16.mxu0 0
        %901 = vmatpush1.bf16.msra.mxu0 0
        %902 = vmatprep.subr.bf16.mxu0 0
        %903 = vmatpush1.bf16.msra.mxu0 0
        %904 = vmatprep.subr.bf16.mxu0 0
        %905 = vmatpush1.bf16.msra.mxu0 0
        %906 = vmatprep.mubr.bf16.mxu0 0
        %907 = vmatmul.mubr.bf16.gmra.mrb[0].mxu0 %v872
        %v908 = vpop.f32.mrb[0].mxu0
        %v909 = vadd.f32 %v856, %v908
        %v910 = vpop.f32.mrb[0].mxu0
        %v911 = vpop.f32.mrb[0].mxu0
        %v912 = vadd.f32 %v856, %v911
        %v913 = vpop.f32.mrb[0].mxu0
        %914 = vdwg.mxu0
        %v915 = vpack.c.bf16 %v912, %v909
        %vm916 = vcmask 785408
        %917 = vst.msk [vmem:[#allocation3] sm:$0xff] %vm916, %v915
        %v918 = vld [vmem:[#allocation3] sm:$0xff]
        %920 = vrot.lane.b32.xlu0 %v918, 96
        %v921 = vpop.permute.xlu0 %920
        %vm922 = vcmask 64512
        %v924 = vsel %vm922, %v918, 0
        %v927 = vsel %vm922, %v921, 0
        %929 = vmatprep.subr.bf16.mxu0 0
        %930 = vmatpush1.bf16.xpose.msra.mxu0 %v927
        %931 = vmatprep.subr.bf16.mxu0 0
        %932 = vmatpush1.bf16.xpose.msra.mxu0 0
        %933 = vmatprep.subr.bf16.mxu0 0
        %934 = vmatpush1.bf16.xpose.msra.mxu0 0
        %935 = vmatprep.subr.bf16.mxu0 0
        %936 = vmatpush1.bf16.xpose.msra.mxu0 0
        %937 = vmatprep.subr.bf16.mxu0 0
        %938 = vmatpush1.bf16.xpose.msra.mxu0 0
        %939 = vmatprep.subr.bf16.mxu0 0
        %940 = vmatpush1.bf16.xpose.msra.mxu0 0
        %941 = vmatprep.subr.bf16.mxu0 0
        %942 = vmatpush1.bf16.xpose.msra.mxu0 0
        %943 = vmatprep.subr.bf16.mxu0 0
        %944 = vmatpush1.bf16.xpose.msra.mxu0 0
        %945 = vmatprep.subr.bf16.mxu0 0
        %946 = vmatpush1.bf16.xpose.msra.mxu0 0
        %947 = vmatprep.subr.bf16.mxu0 0
        %948 = vmatpush1.bf16.xpose.msra.mxu0 0
        %949 = vmatprep.subr.bf16.mxu0 0
        %950 = vmatpush1.bf16.xpose.msra.mxu0 0
        %951 = vmatprep.subr.bf16.mxu0 0
        %952 = vmatpush1.bf16.xpose.msra.mxu0 0
        %953 = vmatprep.subr.bf16.mxu0 0
        %954 = vmatpush1.bf16.xpose.msra.mxu0 0
        %955 = vmatprep.subr.bf16.mxu0 0
        %956 = vmatpush1.bf16.xpose.msra.mxu0 0
        %957 = vmatprep.subr.bf16.mxu0 0
        %958 = vmatpush1.bf16.xpose.msra.mxu0 0
        %959 = vmatprep.subr.bf16.mxu0 0
        %960 = vmatpush1.bf16.xpose.msra.mxu0 0
        %961 = vmatprep.mubr.bf16.mxu0 0
        %962 = vmatmul.mubr.bf16.gmra.mrb[0].mxu0 %v924
        %v963 = vpop.f32.mrb[0].mxu0
        %v964 = vadd.f32 0.0, %v963
        %v965 = vpop.f32.mrb[0].mxu0
        %v966 = vpop.f32.mrb[0].mxu0
        %v967 = vadd.f32 0.0, %v966
        %v968 = vpop.f32.mrb[0].mxu0
        %969 = vdwg.mxu0
        %v970 = vmul.f32 %v964, 0.35355338
        %v971 = vmul.f32 %v967, 0.35355338
        %vm972 = vcmask 130048
        %v973 = vsel %vm972, %v970, -inf
        %974 = vmax.xlane.f32.xlu0 %v973
        %v975 = vpop.xlane.xlu0 %974
        %v976 = vsel %vm972, %v971, -inf
        %977 = vmax.xlane.f32.xlu0 %v976
        %v978 = vpop.xlane.xlu0 %977
        %v979 = vsub.f32 %v970, %v975
        %v980 = vsub.f32 %v971, %v978
        %v981 = vmul.f32 %v979, 1.442695
        %v982 = vpow.pop %v981
        %v983 = vmul.f32 %v980, 1.442695
        %v984 = vpow.pop %v983
        %v985 = vsel %vm972, %v982, 0.0
        %986 = vadd.xlane.f32.xlu0 %v985
        %v987 = vpop.xlane.xlu0 %986
        %v988 = vsel %vm972, %v984, 0.0
        %989 = vadd.xlane.f32.xlu0 %v988
        %v990 = vpop.xlane.xlu0 %989
        %v991 = vrcp.pop %v987
        %v992 = vrcp.pop %v990
        %v993 = vmul.f32 %v982, %v991
        %v994 = vmul.f32 %v984, %v992
        %v995 = vpack.c.bf16 %v994, %v993
        %996 = vrot.lane.b32.xlu0 %v918, 64
        %v997 = vpop.permute.xlu0 %996
        %v1000 = vsel %vm972, %v995, 0
        %1002 = vmatprep.subr.bf16.mxu0 0
        %1003 = vmatpush1.bf16.msra.mxu0 %v997
        %1004 = vmatprep.subr.bf16.mxu0 0
        %1005 = vmatpush1.bf16.msra.mxu0 0
        %1006 = vmatprep.subr.bf16.mxu0 0
        %1007 = vmatpush1.bf16.msra.mxu0 0
        %1008 = vmatprep.subr.bf16.mxu0 0
        %1009 = vmatpush1.bf16.msra.mxu0 0
        %1010 = vmatprep.subr.bf16.mxu0 0
        %1011 = vmatpush1.bf16.msra.mxu0 0
        %1012 = vmatprep.subr.bf16.mxu0 0
        %1013 = vmatpush1.bf16.msra.mxu0 0
        %1014 = vmatprep.subr.bf16.mxu0 0
        %1015 = vmatpush1.bf16.msra.mxu0 0
        %1016 = vmatprep.subr.bf16.mxu0 0
        %1017 = vmatpush1.bf16.msra.mxu0 0
        %1018 = vmatprep.subr.bf16.mxu0 0
        %1019 = vmatpush1.bf16.msra.mxu0 0
        %1020 = vmatprep.subr.bf16.mxu0 0
        %1021 = vmatpush1.bf16.msra.mxu0 0
        %1022 = vmatprep.subr.bf16.mxu0 0
        %1023 = vmatpush1.bf16.msra.mxu0 0
        %1024 = vmatprep.subr.bf16.mxu0 0
        %1025 = vmatpush1.bf16.msra.mxu0 0
        %1026 = vmatprep.subr.bf16.mxu0 0
        %1027 = vmatpush1.bf16.msra.mxu0 0
        %1028 = vmatprep.subr.bf16.mxu0 0
        %1029 = vmatpush1.bf16.msra.mxu0 0
        %1030 = vmatprep.subr.bf16.mxu0 0
        %1031 = vmatpush1.bf16.msra.mxu0 0
        %1032 = vmatprep.subr.bf16.mxu0 0
        %1033 = vmatpush1.bf16.msra.mxu0 0
        %1034 = vmatprep.mubr.bf16.mxu0 0
        %1035 = vmatmul.mubr.bf16.gmra.mrb[0].mxu0 %v1000
        %v1036 = vpop.f32.mrb[0].mxu0
        %v1037 = vadd.f32 0.0, %v1036
        %v1038 = vpop.f32.mrb[0].mxu0
        %v1039 = vpop.f32.mrb[0].mxu0
        %v1040 = vadd.f32 0.0, %v1039
        %v1041 = vpop.f32.mrb[0].mxu0
        %1042 = vdwg.mxu0
        %1043 = vrot.lane.b32.xlu0 %v918, 120
        %v1044 = vpop.permute.xlu0 %1043
        %1045 = vrot.lane.b32.xlu0 %v918, 88
        %v1046 = vpop.permute.xlu0 %1045
        %v1048 = vsel %vm922, %v1044, 0
        %v1051 = vsel %vm922, %v1046, 0
        %1053 = vmatprep.subr.bf16.mxu0 0
        %1054 = vmatpush1.bf16.xpose.msra.mxu0 %v1051
        %1055 = vmatprep.subr.bf16.mxu0 0
        %1056 = vmatpush1.bf16.xpose.msra.mxu0 0
        %1057 = vmatprep.subr.bf16.mxu0 0
        %1058 = vmatpush1.bf16.xpose.msra.mxu0 0
        %1059 = vmatprep.subr.bf16.mxu0 0
        %1060 = vmatpush1.bf16.xpose.msra.mxu0 0
        %1061 = vmatprep.subr.bf16.mxu0 0
        %1062 = vmatpush1.bf16.xpose.msra.mxu0 0
        %1063 = vmatprep.subr.bf16.mxu0 0
        %1064 = vmatpush1.bf16.xpose.msra.mxu0 0
        %1065 = vmatprep.subr.bf16.mxu0 0
        %1066 = vmatpush1.bf16.xpose.msra.mxu0 0
        %1067 = vmatprep.subr.bf16.mxu0 0
        %1068 = vmatpush1.bf16.xpose.msra.mxu0 0
        %1069 = vmatprep.subr.bf16.mxu0 0
        %1070 = vmatpush1.bf16.xpose.msra.mxu0 0
        %1071 = vmatprep.subr.bf16.mxu0 0
        %1072 = vmatpush1.bf16.xpose.msra.mxu0 0
        %1073 = vmatprep.subr.bf16.mxu0 0
        %1074 = vmatpush1.bf16.xpose.msra.mxu0 0
        %1075 = vmatprep.subr.bf16.mxu0 0
        %1076 = vmatpush1.bf16.xpose.msra.mxu0 0
        %1077 = vmatprep.subr.bf16.mxu0 0
        %1078 = vmatpush1.bf16.xpose.msra.mxu0 0
        %1079 = vmatprep.subr.bf16.mxu0 0
        %1080 = vmatpush1.bf16.xpose.msra.mxu0 0
        %1081 = vmatprep.subr.bf16.mxu0 0
        %1082 = vmatpush1.bf16.xpose.msra.mxu0 0
        %1083 = vmatprep.subr.bf16.mxu0 0
        %1084 = vmatpush1.bf16.xpose.msra.mxu0 0
        %1085 = vmatprep.mubr.bf16.mxu0 0
        %1086 = vmatmul.mubr.bf16.gmra.mrb[0].mxu0 %v1048
        %v1087 = vpop.f32.mrb[0].mxu0
        %v1088 = vadd.f32 0.0, %v1087
        %v1089 = vpop.f32.mrb[0].mxu0
        %v1090 = vpop.f32.mrb[0].mxu0
        %v1091 = vadd.f32 0.0, %v1090
        %v1092 = vpop.f32.mrb[0].mxu0
        %1093 = vdwg.mxu0
        %v1094 = vmul.f32 %v1088, 0.35355338
        %v1095 = vmul.f32 %v1091, 0.35355338
        %v1096 = vsel %vm972, %v1094, -inf
        %1097 = vmax.xlane.f32.xlu0 %v1096
        %v1098 = vpop.xlane.xlu0 %1097
        %v1099 = vsel %vm972, %v1095, -inf
        %1100 = vmax.xlane.f32.xlu0 %v1099
        %v1101 = vpop.xlane.xlu0 %1100
        %v1102 = vsub.f32 %v1094, %v1098
        %v1103 = vsub.f32 %v1095, %v1101
        %v1104 = vmul.f32 %v1102, 1.442695
        %v1105 = vpow.pop %v1104
        %v1106 = vmul.f32 %v1103, 1.442695
        %v1107 = vpow.pop %v1106
        %v1108 = vsel %vm972, %v1105, 0.0
        %1109 = vadd.xlane.f32.xlu0 %v1108
        %v1110 = vpop.xlane.xlu0 %1109
        %v1111 = vsel %vm972, %v1107, 0.0
        %1112 = vadd.xlane.f32.xlu0 %v1111
        %v1113 = vpop.xlane.xlu0 %1112
        %v1114 = vrcp.pop %v1110
        %v1115 = vrcp.pop %v1113
        %v1116 = vmul.f32 %v1105, %v1114
        %v1117 = vmul.f32 %v1107, %v1115
        %v1118 = vpack.c.bf16 %v1117, %v1116
        %1119 = vrot.lane.b32.xlu0 %v918, 56
        %v1120 = vpop.permute.xlu0 %1119
        %v1123 = vsel %vm972, %v1118, 0
        %1125 = vmatprep.subr.bf16.mxu0 0
        %1126 = vmatpush1.bf16.msra.mxu0 %v1120
        %1127 = vmatprep.subr.bf16.mxu0 0
        %1128 = vmatpush1.bf16.msra.mxu0 0
        %1129 = vmatprep.subr.bf16.mxu0 0
        %1130 = vmatpush1.bf16.msra.mxu0 0
        %1131 = vmatprep.subr.bf16.mxu0 0
        %1132 = vmatpush1.bf16.msra.mxu0 0
        %1133 = vmatprep.subr.bf16.mxu0 0
        %1134 = vmatpush1.bf16.msra.mxu0 0
        %1135 = vmatprep.subr.bf16.mxu0 0
        %1136 = vmatpush1.bf16.msra.mxu0 0
        %1137 = vmatprep.subr.bf16.mxu0 0
        %1138 = vmatpush1.bf16.msra.mxu0 0
        %1139 = vmatprep.subr.bf16.mxu0 0
        %1140 = vmatpush1.bf16.msra.mxu0 0
        %1141 = vmatprep.subr.bf16.mxu0 0
        %1142 = vmatpush1.bf16.msra.mxu0 0
        %1143 = vmatprep.subr.bf16.mxu0 0
        %1144 = vmatpush1.bf16.msra.mxu0 0
        %1145 = vmatprep.subr.bf16.mxu0 0
        %1146 = vmatpush1.bf16.msra.mxu0 0
        %1147 = vmatprep.subr.bf16.mxu0 0
        %1148 = vmatpush1.bf16.msra.mxu0 0
        %1149 = vmatprep.subr.bf16.mxu0 0
        %1150 = vmatpush1.bf16.msra.mxu0 0
        %1151 = vmatprep.subr.bf16.mxu0 0
        %1152 = vmatpush1.bf16.msra.mxu0 0
        %1153 = vmatprep.subr.bf16.mxu0 0
        %1154 = vmatpush1.bf16.msra.mxu0 0
        %1155 = vmatprep.subr.bf16.mxu0 0
        %1156 = vmatpush1.bf16.msra.mxu0 0
        %1157 = vmatprep.mubr.bf16.mxu0 0
        %1158 = vmatmul.mubr.bf16.gmra.mrb[0].mxu0 %v1123
        %v1159 = vpop.f32.mrb[0].mxu0
        %v1160 = vadd.f32 0.0, %v1159
        %v1161 = vpop.f32.mrb[0].mxu0
        %v1162 = vpop.f32.mrb[0].mxu0
        %v1163 = vadd.f32 0.0, %v1162
        %v1164 = vpop.f32.mrb[0].mxu0
        %1165 = vdwg.mxu0
        %1166 = vrot.lane.b32.xlu0 %v918, 112
        %v1167 = vpop.permute.xlu0 %1166
        %1168 = vrot.lane.b32.xlu0 %v918, 80
        %v1169 = vpop.permute.xlu0 %1168
        %v1171 = vsel %vm922, %v1167, 0
        %v1174 = vsel %vm922, %v1169, 0
        %1176 = vmatprep.subr.bf16.mxu0 0
        %1177 = vmatpush1.bf16.xpose.msra.mxu0 %v1174
        %1178 = vmatprep.subr.bf16.mxu0 0
        %1179 = vmatpush1.bf16.xpose.msra.mxu0 0
        %1180 = vmatprep.subr.bf16.mxu0 0
        %1181 = vmatpush1.bf16.xpose.msra.mxu0 0
        %1182 = vmatprep.subr.bf16.mxu0 0
        %1183 = vmatpush1.bf16.xpose.msra.mxu0 0
        %1184 = vmatprep.subr.bf16.mxu0 0
        %1185 = vmatpush1.bf16.xpose.msra.mxu0 0
        %1186 = vmatprep.subr.bf16.mxu0 0
        %1187 = vmatpush1.bf16.xpose.msra.mxu0 0
        %1188 = vmatprep.subr.bf16.mxu0 0
        %1189 = vmatpush1.bf16.xpose.msra.mxu0 0
        %1190 = vmatprep.subr.bf16.mxu0 0
        %1191 = vmatpush1.bf16.xpose.msra.mxu0 0
        %1192 = vmatprep.subr.bf16.mxu0 0
        %1193 = vmatpush1.bf16.xpose.msra.mxu0 0
        %1194 = vmatprep.subr.bf16.mxu0 0
        %1195 = vmatpush1.bf16.xpose.msra.mxu0 0
        %1196 = vmatprep.subr.bf16.mxu0 0
        %1197 = vmatpush1.bf16.xpose.msra.mxu0 0
        %1198 = vmatprep.subr.bf16.mxu0 0
        %1199 = vmatpush1.bf16.xpose.msra.mxu0 0
        %1200 = vmatprep.subr.bf16.mxu0 0
        %1201 = vmatpush1.bf16.xpose.msra.mxu0 0
        %1202 = vmatprep.subr.bf16.mxu0 0
        %1203 = vmatpush1.bf16.xpose.msra.mxu0 0
        %1204 = vmatprep.subr.bf16.mxu0 0
        %1205 = vmatpush1.bf16.xpose.msra.mxu0 0
        %1206 = vmatprep.subr.bf16.mxu0 0
        %1207 = vmatpush1.bf16.xpose.msra.mxu0 0
        %1208 = vmatprep.mubr.bf16.mxu0 0
        %1209 = vmatmul.mubr.bf16.gmra.mrb[0].mxu0 %v1171
        %v1210 = vpop.f32.mrb[0].mxu0
        %v1211 = vadd.f32 0.0, %v1210
        %v1212 = vpop.f32.mrb[0].mxu0
        %v1213 = vpop.f32.mrb[0].mxu0
        %v1214 = vadd.f32 0.0, %v1213
        %v1215 = vpop.f32.mrb[0].mxu0
        %1216 = vdwg.mxu0
        %v1217 = vmul.f32 %v1211, 0.35355338
        %v1218 = vmul.f32 %v1214, 0.35355338
        %v1219 = vsel %vm972, %v1217, -inf
        %1220 = vmax.xlane.f32.xlu0 %v1219
        %v1221 = vpop.xlane.xlu0 %1220
        %v1222 = vsel %vm972, %v1218, -inf
        %1223 = vmax.xlane.f32.xlu0 %v1222
        %v1224 = vpop.xlane.xlu0 %1223
        %v1225 = vsub.f32 %v1217, %v1221
        %v1226 = vsub.f32 %v1218, %v1224
        %v1227 = vmul.f32 %v1225, 1.442695
        %v1228 = vpow.pop %v1227
        %v1229 = vmul.f32 %v1226, 1.442695
        %v1230 = vpow.pop %v1229
        %v1231 = vsel %vm972, %v1228, 0.0
        %1232 = vadd.xlane.f32.xlu0 %v1231
        %v1233 = vpop.xlane.xlu0 %1232
        %v1234 = vsel %vm972, %v1230, 0.0
        %1235 = vadd.xlane.f32.xlu0 %v1234
        %v1236 = vpop.xlane.xlu0 %1235
        %v1237 = vrcp.pop %v1233
        %v1238 = vrcp.pop %v1236
        %v1239 = vmul.f32 %v1228, %v1237
        %v1240 = vmul.f32 %v1230, %v1238
        %v1241 = vpack.c.bf16 %v1240, %v1239
        %1242 = vrot.lane.b32.xlu0 %v918, 48
        %v1243 = vpop.permute.xlu0 %1242
        %v1246 = vsel %vm972, %v1241, 0
        %1248 = vmatprep.subr.bf16.mxu0 0
        %1249 = vmatpush1.bf16.msra.mxu0 %v1243
        %1250 = vmatprep.subr.bf16.mxu0 0
        %1251 = vmatpush1.bf16.msra.mxu0 0
        %1252 = vmatprep.subr.bf16.mxu0 0
        %1253 = vmatpush1.bf16.msra.mxu0 0
        %1254 = vmatprep.subr.bf16.mxu0 0
        %1255 = vmatpush1.bf16.msra.mxu0 0
        %1256 = vmatprep.subr.bf16.mxu0 0
        %1257 = vmatpush1.bf16.msra.mxu0 0
        %1258 = vmatprep.subr.bf16.mxu0 0
        %1259 = vmatpush1.bf16.msra.mxu0 0
        %1260 = vmatprep.subr.bf16.mxu0 0
        %1261 = vmatpush1.bf16.msra.mxu0 0
        %1262 = vmatprep.subr.bf16.mxu0 0
        %1263 = vmatpush1.bf16.msra.mxu0 0
        %1264 = vmatprep.subr.bf16.mxu0 0
        %1265 = vmatpush1.bf16.msra.mxu0 0
        %1266 = vmatprep.subr.bf16.mxu0 0
        %1267 = vmatpush1.bf16.msra.mxu0 0
        %1268 = vmatprep.subr.bf16.mxu0 0
        %1269 = vmatpush1.bf16.msra.mxu0 0
        %1270 = vmatprep.subr.bf16.mxu0 0
        %1271 = vmatpush1.bf16.msra.mxu0 0
        %1272 = vmatprep.subr.bf16.mxu0 0
        %1273 = vmatpush1.bf16.msra.mxu0 0
        %1274 = vmatprep.subr.bf16.mxu0 0
        %1275 = vmatpush1.bf16.msra.mxu0 0
        %1276 = vmatprep.subr.bf16.mxu0 0
        %1277 = vmatpush1.bf16.msra.mxu0 0
        %1278 = vmatprep.subr.bf16.mxu0 0
        %1279 = vmatpush1.bf16.msra.mxu0 0
        %1280 = vmatprep.mubr.bf16.mxu0 0
        %1281 = vmatmul.mubr.bf16.gmra.mrb[0].mxu0 %v1246
        %v1282 = vpop.f32.mrb[0].mxu0
        %v1283 = vadd.f32 0.0, %v1282
        %v1284 = vpop.f32.mrb[0].mxu0
        %v1285 = vpop.f32.mrb[0].mxu0
        %v1286 = vadd.f32 0.0, %v1285
        %v1287 = vpop.f32.mrb[0].mxu0
        %1288 = vdwg.mxu0
        %1289 = vrot.lane.b32.xlu0 %v918, 104
        %v1290 = vpop.permute.xlu0 %1289
        %1291 = vrot.lane.b32.xlu0 %v918, 72
        %v1292 = vpop.permute.xlu0 %1291
        %v1294 = vsel %vm922, %v1290, 0
        %v1297 = vsel %vm922, %v1292, 0
        %1299 = vmatprep.subr.bf16.mxu0 0
        %1300 = vmatpush1.bf16.xpose.msra.mxu0 %v1297
        %1301 = vmatprep.subr.bf16.mxu0 0
        %1302 = vmatpush1.bf16.xpose.msra.mxu0 0
        %1303 = vmatprep.subr.bf16.mxu0 0
        %1304 = vmatpush1.bf16.xpose.msra.mxu0 0
        %1305 = vmatprep.subr.bf16.mxu0 0
        %1306 = vmatpush1.bf16.xpose.msra.mxu0 0
        %1307 = vmatprep.subr.bf16.mxu0 0
        %1308 = vmatpush1.bf16.xpose.msra.mxu0 0
        %1309 = vmatprep.subr.bf16.mxu0 0
        %1310 = vmatpush1.bf16.xpose.msra.mxu0 0
        %1311 = vmatprep.subr.bf16.mxu0 0
        %1312 = vmatpush1.bf16.xpose.msra.mxu0 0
        %1313 = vmatprep.subr.bf16.mxu0 0
        %1314 = vmatpush1.bf16.xpose.msra.mxu0 0
        %1315 = vmatprep.subr.bf16.mxu0 0
        %1316 = vmatpush1.bf16.xpose.msra.mxu0 0
        %1317 = vmatprep.subr.bf16.mxu0 0
        %1318 = vmatpush1.bf16.xpose.msra.mxu0 0
        %1319 = vmatprep.subr.bf16.mxu0 0
        %1320 = vmatpush1.bf16.xpose.msra.mxu0 0
        %1321 = vmatprep.subr.bf16.mxu0 0
        %1322 = vmatpush1.bf16.xpose.msra.mxu0 0
        %1323 = vmatprep.subr.bf16.mxu0 0
        %1324 = vmatpush1.bf16.xpose.msra.mxu0 0
        %1325 = vmatprep.subr.bf16.mxu0 0
        %1326 = vmatpush1.bf16.xpose.msra.mxu0 0
        %1327 = vmatprep.subr.bf16.mxu0 0
        %1328 = vmatpush1.bf16.xpose.msra.mxu0 0
        %1329 = vmatprep.subr.bf16.mxu0 0
        %1330 = vmatpush1.bf16.xpose.msra.mxu0 0
        %1331 = vmatprep.mubr.bf16.mxu0 0
        %1332 = vmatmul.mubr.bf16.gmra.mrb[0].mxu0 %v1294
        %v1333 = vpop.f32.mrb[0].mxu0
        %v1334 = vadd.f32 0.0, %v1333
        %v1335 = vpop.f32.mrb[0].mxu0
        %v1336 = vpop.f32.mrb[0].mxu0
        %v1337 = vadd.f32 0.0, %v1336
        %v1338 = vpop.f32.mrb[0].mxu0
        %1339 = vdwg.mxu0
        %v1340 = vmul.f32 %v1334, 0.35355338
        %v1341 = vmul.f32 %v1337, 0.35355338
        %v1342 = vsel %vm972, %v1340, -inf
        %1343 = vmax.xlane.f32.xlu0 %v1342
        %v1344 = vpop.xlane.xlu0 %1343
        %v1345 = vsel %vm972, %v1341, -inf
        %1346 = vmax.xlane.f32.xlu0 %v1345
        %v1347 = vpop.xlane.xlu0 %1346
        %v1348 = vsub.f32 %v1340, %v1344
        %v1349 = vsub.f32 %v1341, %v1347
        %v1350 = vmul.f32 %v1348, 1.442695
        %v1351 = vpow.pop %v1350
        %v1352 = vmul.f32 %v1349, 1.442695
        %v1353 = vpow.pop %v1352
        %v1354 = vsel %vm972, %v1351, 0.0
        %1355 = vadd.xlane.f32.xlu0 %v1354
        %v1356 = vpop.xlane.xlu0 %1355
        %v1357 = vsel %vm972, %v1353, 0.0
        %1358 = vadd.xlane.f32.xlu0 %v1357
        %v1359 = vpop.xlane.xlu0 %1358
        %v1360 = vrcp.pop %v1356
        %v1361 = vrcp.pop %v1359
        %v1362 = vmul.f32 %v1351, %v1360
        %v1363 = vmul.f32 %v1353, %v1361
        %v1364 = vpack.c.bf16 %v1363, %v1362
        %1365 = vrot.lane.b32.xlu0 %v918, 40
        %v1366 = vpop.permute.xlu0 %1365
        %v1369 = vsel %vm972, %v1364, 0
        %1371 = vmatprep.subr.bf16.mxu0 0
        %1372 = vmatpush1.bf16.msra.mxu0 %v1366
        %1373 = vmatprep.subr.bf16.mxu0 0
        %1374 = vmatpush1.bf16.msra.mxu0 0
        %1375 = vmatprep.subr.bf16.mxu0 0
        %1376 = vmatpush1.bf16.msra.mxu0 0
        %1377 = vmatprep.subr.bf16.mxu0 0
        %1378 = vmatpush1.bf16.msra.mxu0 0
        %1379 = vmatprep.subr.bf16.mxu0 0
        %1380 = vmatpush1.bf16.msra.mxu0 0
        %1381 = vmatprep.subr.bf16.mxu0 0
        %1382 = vmatpush1.bf16.msra.mxu0 0
        %1383 = vmatprep.subr.bf16.mxu0 0
        %1384 = vmatpush1.bf16.msra.mxu0 0
        %1385 = vmatprep.subr.bf16.mxu0 0
        %1386 = vmatpush1.bf16.msra.mxu0 0
        %1387 = vmatprep.subr.bf16.mxu0 0
        %1388 = vmatpush1.bf16.msra.mxu0 0
        %1389 = vmatprep.subr.bf16.mxu0 0
        %1390 = vmatpush1.bf16.msra.mxu0 0
        %1391 = vmatprep.subr.bf16.mxu0 0
        %1392 = vmatpush1.bf16.msra.mxu0 0
        %1393 = vmatprep.subr.bf16.mxu0 0
        %1394 = vmatpush1.bf16.msra.mxu0 0
        %1395 = vmatprep.subr.bf16.mxu0 0
        %1396 = vmatpush1.bf16.msra.mxu0 0
        %1397 = vmatprep.subr.bf16.mxu0 0
        %1398 = vmatpush1.bf16.msra.mxu0 0
        %1399 = vmatprep.subr.bf16.mxu0 0
        %1400 = vmatpush1.bf16.msra.mxu0 0
        %1401 = vmatprep.subr.bf16.mxu0 0
        %1402 = vmatpush1.bf16.msra.mxu0 0
        %1403 = vmatprep.mubr.bf16.mxu0 0
        %1404 = vmatmul.mubr.bf16.gmra.mrb[0].mxu0 %v1369
        %v1405 = vpop.f32.mrb[0].mxu0
        %v1406 = vadd.f32 0.0, %v1405
        %v1407 = vpop.f32.mrb[0].mxu0
        %v1408 = vpop.f32.mrb[0].mxu0
        %v1409 = vadd.f32 0.0, %v1408
        %v1410 = vpop.f32.mrb[0].mxu0
        %1411 = vdwg.mxu0
        %1414 = vrot.lane.b32.xlu0 %v1160, 8
        %v1415 = vpop.permute.xlu0 %1414
        %1416 = vrot.lane.b32.xlu0 %v1163, 8
        %v1417 = vpop.permute.xlu0 %1416
        %1422 = vrot.lane.b32.xlu0 %v1283, 16
        %v1423 = vpop.permute.xlu0 %1422
        %1424 = vrot.lane.b32.xlu0 %v1286, 16
        %v1425 = vpop.permute.xlu0 %1424
        %1430 = vrot.lane.b32.xlu0 %v1406, 24
        %v1431 = vpop.permute.xlu0 %1430
        %1432 = vrot.lane.b32.xlu0 %v1409, 24
        %v1433 = vpop.permute.xlu0 %1432
        %v1436 = vsel %vm922, %v1037, %v1415
        %v1437 = vsel %vm922, %v1040, %v1417
        %v1438 = vsel %vm972, %v1436, %v1423
        %v1439 = vsel %vm972, %v1437, %v1425
        %vm1440 = vcmask 195584
        %v1441 = vsel %vm1440, %v1438, %v1431
        %v1442 = vsel %vm1440, %v1439, %v1433
        %1443 = vst.msk [vmem:[#allocation4] sm:$0xff] %vm870, %v1441
        %1444 = vst.msk [vmem:[#allocation4 + $0x8] sm:$0xff] %vm870, %v1442
        %v1445 = vld [vmem:[#allocation4] sm:$0xff]
        %v1446 = vld [vmem:[#allocation4 + $0x8] sm:$0xff]
        %v1447 = vpack.c.bf16 %v1446, %v1445
        %v1448 = vld [vmem:[%s707] sm:$0xf]
        %v1449 = vld [vmem:[%s707 + $0x4] sm:$0xf]
        %v1450 = vld [vmem:[%s707 + $0x8] sm:$0xf]
        %v1451 = vld [vmem:[%s707 + $0xc] sm:$0xf]
        %v1452 = vld [vmem:[%s710] sm:$0x1]
        %v1454 = vlaneseq
        %v1455 = vshrl.u32 %v1454, 7
        %v1456 = vsub.s32 0, %v1455
        %v1457 = vrot.slane %v1452, %v1456
        %v1463 = vunpack.c.l.b16 %v1448
        %v1464 = vunpack.c.l.b16 %v1449
        %v1465 = vunpack.c.l.b16 %v1450
        %v1466 = vunpack.c.l.b16 %v1451
        %v1467 = vpack.c.b16 %v1464, %v1463
        %v1468 = vpack.c.b16 %v1466, %v1465
        %v1472 = vsel %vm870, %v1447, 0
        %1474 = vmatprep.subr.bf16.mxu0 0
        %1475 = vmatpush1.bf16.msra.mxu0 %v1467
        %1476 = vmatprep.subr.bf16.mxu0 0
        %1477 = vmatpush1.bf16.msra.mxu0 %v1468
        %1478 = vmatprep.subr.bf16.mxu0 0
        %1479 = vmatpush1.bf16.msra.mxu0 0
        %1480 = vmatprep.subr.bf16.mxu0 0
        %1481 = vmatpush1.bf16.msra.mxu0 0
        %1482 = vmatprep.subr.bf16.mxu0 0
        %1483 = vmatpush1.bf16.msra.mxu0 0
        %1484 = vmatprep.subr.bf16.mxu0 0
        %1485 = vmatpush1.bf16.msra.mxu0 0
        %1486 = vmatprep.subr.bf16.mxu0 0
        %1487 = vmatpush1.bf16.msra.mxu0 0
        %1488 = vmatprep.subr.bf16.mxu0 0
        %1489 = vmatpush1.bf16.msra.mxu0 0
        %1490 = vmatprep.subr.bf16.mxu0 0
        %1491 = vmatpush1.bf16.msra.mxu0 0
        %1492 = vmatprep.subr.bf16.mxu0 0
        %1493 = vmatpush1.bf16.msra.mxu0 0
        %1494 = vmatprep.subr.bf16.mxu0 0
        %1495 = vmatpush1.bf16.msra.mxu0 0
        %1496 = vmatprep.subr.bf16.mxu0 0
        %1497 = vmatpush1.bf16.msra.mxu0 0
        %1498 = vmatprep.subr.bf16.mxu0 0
        %1499 = vmatpush1.bf16.msra.mxu0 0
        %1500 = vmatprep.subr.bf16.mxu0 0
        %1501 = vmatpush1.bf16.msra.mxu0 0
        %1502 = vmatprep.subr.bf16.mxu0 0
        %1503 = vmatpush1.bf16.msra.mxu0 0
        %1504 = vmatprep.subr.bf16.mxu0 0
        %1505 = vmatpush1.bf16.msra.mxu0 0
        %1506 = vmatprep.mubr.bf16.mxu0 0
        %1507 = vmatmul.mubr.bf16.gmra.mrb[0].mxu0 %v1472
        %v1508 = vpop.f32.mrb[0].mxu0
        %v1509 = vadd.f32 %v1457, %v1508
        %v1510 = vpop.f32.mrb[0].mxu0
        %v1511 = vpop.f32.mrb[0].mxu0
        %v1512 = vadd.f32 %v1457, %v1511
        %v1513 = vpop.f32.mrb[0].mxu0
        %1514 = vdwg.mxu0
        %v1515 = vld [vmem:[#allocation2] sm:$0xff]
        %v1516 = vld [vmem:[#allocation2 + $0x8] sm:$0xff]
        %v1517 = vadd.f32 %v1515, %v1509
        %v1518 = vadd.f32 %v1516, %v1512
        %v1519 = vld [vmem:[%s713] sm:$0x1]
        %v1520 = vld [vmem:[%s716] sm:$0x1]
        %v1521 = vsel %vm870, %v1517, 0.0
        %1522 = vadd.xlane.f32.xlu0 %v1521
        %v1523 = vpop.xlane.xlu0 %1522
        %v1524 = vsel %vm870, %v1518, 0.0
        %1525 = vadd.xlane.f32.xlu0 %v1524
        %v1526 = vpop.xlane.xlu0 %1525
        %v1527 = vrcp.pop 32.0
        %v1528 = vmul.f32 %v1523, %v1527
        %v1529 = vmul.f32 %v1526, %v1527
        %v1530 = vsub.f32 %v1517, %v1528
        %v1531 = vsub.f32 %v1518, %v1529
        %v1532 = vmul.f32 %v1530, %v1530
        %v1533 = vmul.f32 %v1531, %v1531
        %v1534 = vsel %vm870, %v1532, 0.0
        %1535 = vadd.xlane.f32.xlu0 %v1534
        %v1536 = vpop.xlane.xlu0 %1535
        %v1537 = vsel %vm870, %v1533, 0.0
        %1538 = vadd.xlane.f32.xlu0 %v1537
        %v1539 = vpop.xlane.xlu0 %1538
        %v1540 = vmul.f32 %v1536, %v1527
        %v1541 = vmul.f32 %v1539, %v1527
        %v1542 = vadd.f32 %v1540, 1e-05
        %v1543 = vadd.f32 %v1541, 1e-05
        %v1544 = vrsqrt.pop %v1542
        %v1545 = vrsqrt.pop %v1543
        %v1546 = vmul.f32 %v1530, %v1544
        %v1547 = vmul.f32 %v1531, %v1545
        %v1549 = vlaneseq
        %v1550 = vshrl.u32 %v1549, 7
        %v1551 = vsub.s32 0, %v1550
        %v1552 = vrot.slane %v1519, %v1551
        %v1554 = vmul.f32 %v1546, %v1552
        %v1555 = vmul.f32 %v1547, %v1552
        %v1557 = vlaneseq
        %v1558 = vshrl.u32 %v1557, 7
        %v1559 = vsub.s32 0, %v1558
        %v1560 = vrot.slane %v1520, %v1559
        %v1562 = vadd.f32 %v1554, %v1560
        %v1563 = vadd.f32 %v1555, %v1560
        %v1564 = vpack.c.bf16 %v1563, %v1562
        %v1565 = vld [vmem:[%s721] sm:$0xf]
        %v1566 = vld [vmem:[%s721 + $0x4] sm:$0xf]
        %v1567 = vld [vmem:[%s721 + $0x8] sm:$0xf]
        %v1568 = vld [vmem:[%s721 + $0xc] sm:$0xf]
        %v1569 = vld [vmem:[%s724] sm:$0x1]
        %v1571 = vlaneseq
        %v1572 = vshrl.u32 %v1571, 7
        %v1573 = vsub.s32 0, %v1572
        %v1574 = vrot.slane %v1569, %v1573
        %v1580 = vunpack.c.l.b16 %v1565
        %v1581 = vunpack.c.l.b16 %v1566
        %v1582 = vunpack.c.l.b16 %v1567
        %v1583 = vunpack.c.l.b16 %v1568
        %v1584 = vpack.c.b16 %v1581, %v1580
        %v1585 = vpack.c.b16 %v1583, %v1582
        %v1589 = vsel %vm870, %v1564, 0
        %1591 = vmatprep.subr.bf16.mxu0 0
        %1592 = vmatpush1.bf16.msra.mxu0 %v1584
        %1593 = vmatprep.subr.bf16.mxu0 0
        %1594 = vmatpush1.bf16.msra.mxu0 %v1585
        %1595 = vmatprep.subr.bf16.mxu0 0
        %1596 = vmatpush1.bf16.msra.mxu0 0
        %1597 = vmatprep.subr.bf16.mxu0 0
        %1598 = vmatpush1.bf16.msra.mxu0 0
        %1599 = vmatprep.subr.bf16.mxu0 0
        %1600 = vmatpush1.bf16.msra.mxu0 0
        %1601 = vmatprep.subr.bf16.mxu0 0
        %1602 = vmatpush1.bf16.msra.mxu0 0
        %1603 = vmatprep.subr.bf16.mxu0 0
        %1604 = vmatpush1.bf16.msra.mxu0 0
        %1605 = vmatprep.subr.bf16.mxu0 0
        %1606 = vmatpush1.bf16.msra.mxu0 0
        %1607 = vmatprep.subr.bf16.mxu0 0
        %1608 = vmatpush1.bf16.msra.mxu0 0
        %1609 = vmatprep.subr.bf16.mxu0 0
        %1610 = vmatpush1.bf16.msra.mxu0 0
        %1611 = vmatprep.subr.bf16.mxu0 0
        %1612 = vmatpush1.bf16.msra.mxu0 0
        %1613 = vmatprep.subr.bf16.mxu0 0
        %1614 = vmatpush1.bf16.msra.mxu0 0
        %1615 = vmatprep.subr.bf16.mxu0 0
        %1616 = vmatpush1.bf16.msra.mxu0 0
        %1617 = vmatprep.subr.bf16.mxu0 0
        %1618 = vmatpush1.bf16.msra.mxu0 0
        %1619 = vmatprep.subr.bf16.mxu0 0
        %1620 = vmatpush1.bf16.msra.mxu0 0
        %1621 = vmatprep.subr.bf16.mxu0 0
        %1622 = vmatpush1.bf16.msra.mxu0 0
        %1623 = vmatprep.mubr.bf16.mxu0 0
        %1624 = vmatmul.mubr.bf16.gmra.mrb[0].mxu0 %v1589
        %v1625 = vpop.f32.mrb[0].mxu0
        %v1626 = vadd.f32 %v1574, %v1625
        %v1627 = vpop.f32.mrb[0].mxu0
        %v1628 = vpop.f32.mrb[0].mxu0
        %v1629 = vadd.f32 %v1574, %v1628
        %v1630 = vpop.f32.mrb[0].mxu0
        %1631 = vdwg.mxu0
        %v1632 = vmul.f32 %v1626, 0.5
        %v1633 = vmul.f32 %v1629, 0.5
        %v1634 = vmul.f32 %v1626, 0.044715
        %v1635 = vmul.f32 %v1629, 0.044715
        %v1636 = vmul.f32 %v1634, %v1626
        %v1637 = vmul.f32 %v1635, %v1629
        %v1638 = vmul.f32 %v1636, %v1626
        %v1639 = vmul.f32 %v1637, %v1629
        %v1640 = vadd.f32 %v1626, %v1638
        %v1641 = vadd.f32 %v1629, %v1639
        %v1642 = vmul.f32 %v1640, 0.7978846
        %v1643 = vmul.f32 %v1641, 0.7978846
        %v1644 = vtanh.pop %v1642
        %v1645 = vtanh.pop %v1643
        %v1646 = vadd.f32 %v1644, 1.0
        %v1647 = vadd.f32 %v1645, 1.0
        %v1648 = vmul.f32 %v1632, %v1646
        %v1649 = vmul.f32 %v1633, %v1647
        %v1650 = vpack.c.bf16 %v1649, %v1648
        %v1651 = vld [vmem:[%s729] sm:$0xf]
        %v1652 = vld [vmem:[%s729 + $0x4] sm:$0xf]
        %v1653 = vld [vmem:[%s729 + $0x8] sm:$0xf]
        %v1654 = vld [vmem:[%s729 + $0xc] sm:$0xf]
        %v1655 = vld [vmem:[%s729 + $0x10] sm:$0xf]
        %v1656 = vld [vmem:[%s729 + $0x14] sm:$0xf]
        %v1657 = vld [vmem:[%s729 + $0x18] sm:$0xf]
        %v1658 = vld [vmem:[%s729 + $0x1c] sm:$0xf]
        %v1667 = vunpack.c.l.b16 %v1651
        %v1668 = vunpack.c.l.b16 %v1652
        %v1669 = vunpack.c.l.b16 %v1653
        %v1670 = vunpack.c.l.b16 %v1654
        %v1671 = vunpack.c.l.b16 %v1655
        %v1672 = vunpack.c.l.b16 %v1656
        %v1673 = vunpack.c.l.b16 %v1657
        %v1674 = vunpack.c.l.b16 %v1658
        %v1675 = vpack.c.b16 %v1668, %v1667
        %v1676 = vpack.c.b16 %v1670, %v1669
        %v1677 = vpack.c.b16 %v1672, %v1671
        %v1678 = vpack.c.b16 %v1674, %v1673
        %vm1683 = vcmask 523264
        %v1685 = vsel %vm1683, %v1650, 0
        %1687 = vmatprep.subr.bf16.mxu0 0
        %1688 = vmatpush1.bf16.msra.mxu0 %v1675
        %1689 = vmatprep.subr.bf16.mxu0 0
        %1690 = vmatpush1.bf16.msra.mxu0 %v1676
        %1691 = vmatprep.subr.bf16.mxu0 0
        %1692 = vmatpush1.bf16.msra.mxu0 %v1677
        %1693 = vmatprep.subr.bf16.mxu0 0
        %1694 = vmatpush1.bf16.msra.mxu0 %v1678
        %1695 = vmatprep.subr.bf16.mxu0 0
        %1696 = vmatpush1.bf16.msra.mxu0 0
        %1697 = vmatprep.subr.bf16.mxu0 0
        %1698 = vmatpush1.bf16.msra.mxu0 0
        %1699 = vmatprep.subr.bf16.mxu0 0
        %1700 = vmatpush1.bf16.msra.mxu0 0
        %1701 = vmatprep.subr.bf16.mxu0 0
        %1702 = vmatpush1.bf16.msra.mxu0 0
        %1703 = vmatprep.subr.bf16.mxu0 0
        %1704 = vmatpush1.bf16.msra.mxu0 0
        %1705 = vmatprep.subr.bf16.mxu0 0
        %1706 = vmatpush1.bf16.msra.mxu0 0
        %1707 = vmatprep.subr.bf16.mxu0 0
        %1708 = vmatpush1.bf16.msra.mxu0 0
        %1709 = vmatprep.subr.bf16.mxu0 0
        %1710 = vmatpush1.bf16.msra.mxu0 0
        %1711 = vmatprep.subr.bf16.mxu0 0
        %1712 = vmatpush1.bf16.msra.mxu0 0
        %1713 = vmatprep.subr.bf16.mxu0 0
        %1714 = vmatpush1.bf16.msra.mxu0 0
        %1715 = vmatprep.subr.bf16.mxu0 0
        %1716 = vmatpush1.bf16.msra.mxu0 0
        %1717 = vmatprep.subr.bf16.mxu0 0
        %1718 = vmatpush1.bf16.msra.mxu0 0
        %1719 = vmatprep.mubr.bf16.mxu0 0
        %1720 = vmatmul.mubr.bf16.gmra.mrb[0].mxu0 %v1685
        %v1721 = vpop.f32.mrb[0].mxu0
        %v1722 = vadd.f32 0.0, %v1721
        %v1723 = vpop.f32.mrb[0].mxu0
        %v1724 = vpop.f32.mrb[0].mxu0
        %v1725 = vadd.f32 0.0, %v1724
        %v1726 = vpop.f32.mrb[0].mxu0
        %1727 = vdwg.mxu0
        %v1728 = vadd.f32 %v1562, %v1722
        %v1729 = vadd.f32 %v1563, %v1725
        %v1730 = vld [vmem:[%s732] sm:$0x1]
        %v1732 = vlaneseq
        %v1733 = vshrl.u32 %v1732, 7
        %v1734 = vsub.s32 0, %v1733
        %v1735 = vrot.slane %v1730, %v1734
        %v1737 = vadd.f32 %v1728, %v1735
        %v1738 = vadd.f32 %v1729, %v1735
        %v1739 = vld [vmem:[%s735] sm:$0x1]
        %v1740 = vld [vmem:[%s738] sm:$0x1]
        %v1741 = vsel %vm870, %v1737, 0.0
        %1742 = vadd.xlane.f32.xlu0 %v1741
        %v1743 = vpop.xlane.xlu0 %1742
        %v1744 = vsel %vm870, %v1738, 0.0
        %1745 = vadd.xlane.f32.xlu0 %v1744
        %v1746 = vpop.xlane.xlu0 %1745
        %v1747 = vmul.f32 %v1743, %v1527
        %v1748 = vmul.f32 %v1746, %v1527
        %v1749 = vsub.f32 %v1737, %v1747
        %v1750 = vsub.f32 %v1738, %v1748
        %v1751 = vmul.f32 %v1749, %v1749
        %v1752 = vmul.f32 %v1750, %v1750
        %v1753 = vsel %vm870, %v1751, 0.0
        %1754 = vadd.xlane.f32.xlu0 %v1753
        %v1755 = vpop.xlane.xlu0 %1754
        %v1756 = vsel %vm870, %v1752, 0.0
        %1757 = vadd.xlane.f32.xlu0 %v1756
        %v1758 = vpop.xlane.xlu0 %1757
        %v1759 = vmul.f32 %v1755, %v1527
        %v1760 = vmul.f32 %v1758, %v1527
        %v1761 = vadd.f32 %v1759, 1e-05
        %v1762 = vadd.f32 %v1760, 1e-05
        %v1763 = vrsqrt.pop %v1761
        %v1764 = vrsqrt.pop %v1762
        %v1765 = vmul.f32 %v1749, %v1763
        %v1766 = vmul.f32 %v1750, %v1764
        %v1768 = vlaneseq
        %v1769 = vshrl.u32 %v1768, 7
        %v1770 = vsub.s32 0, %v1769
        %v1771 = vrot.slane %v1739, %v1770
        %v1773 = vmul.f32 %v1765, %v1771
        %v1774 = vmul.f32 %v1766, %v1771
        %v1776 = vlaneseq
        %v1777 = vshrl.u32 %v1776, 7
        %v1778 = vsub.s32 0, %v1777
        %v1779 = vrot.slane %v1740, %v1778
        %v1781 = vadd.f32 %v1773, %v1779
        %v1782 = vadd.f32 %v1774, %v1779
        %1783 = vst.msk [vmem:[#allocation2] sm:$0xff] %vm870, %v1781
        %1784 = vst.msk [vmem:[#allocation2 + $0x8] sm:$0xff] %vm870, %v1782
        %p1785 = scmp.eq.s32.totalorder %s36, 1
        // Predicated region
        $region93: #{tpu_custom_call.1} parent=83 // pred_check
          %p1786 = pneg %p1785
        $region94: #{tpu_custom_call.1} parent=83 // pred_check_branch
          %1788 = sbr.rel (%p1786) target = $region96
        $region95: #{tpu_custom_call.1} parent=83 // pred_region
          %1789 = vst.msk [vmem:[%s689] sm:$0xff] %vm870, %v1781
          %1790 = vst.msk [vmem:[%s689 + $0x8] sm:$0xff] %vm870, %v1782
        $region96: #{tpu_custom_call.1} parent=83 // pred_fallthru
          _
        %s1791 = sand.u32 %s452, 1
        %s1792 = scalar_lea.sflag [#allocation7], %s1791
        %s1793 = sand.u32 %s452, 1
        %s1794 = smul.addr %s1793, 16
        %s1795 = scalar_lea.vmem [#allocation8], %s1794
        // Predicated region
        $region97: #{tpu_custom_call.1} parent=83 // pred_check
          %p1796 = pneg %p462
        $region98: #{tpu_custom_call.1} parent=83 // pred_check_branch
          %1798 = sbr.rel (%p1796) target = $region100
        $region99: #{tpu_custom_call.1} parent=83 // pred_region
          %s1800 = ssub.s32 256, 256
          %1801 = vsyncadd %s1792, %s1800
          %s1802 = smul.addr %s35, 2
          %s1803 = smul.addr %s1802, 128
          %s1804 = scalar_lea.hbm %s16, %s1803
          %s1805 = sshll.u32 %s1795, 4
          %s1806 = int_to_ptr.vmem [resolvable:$true] %s1805
          %1811 = dma.vmem_to_hbm [thread:$0]  %s1806, 256, %s1804, %s1792, 128, 128, 8
        $region100: #{tpu_custom_call.1} parent=83 // pred_fallthru
          _
      $region84: #{tpu_custom_call.1} parent=5 // pred_fallthru
        _
      %p1812 = scmp.le.s32.totalorder 2, %s26
      // Predicated region
      $region101: #{tpu_custom_call.1} parent=5 // pred_check
        %p1813 = pneg %p1812
      $region102: #{tpu_custom_call.1} parent=5 // pred_check_branch
        %1815 = sbr.rel (%p1813) target = $region104
      $region103: #{tpu_custom_call.1} parent=5 // pred_region
        %s1816 = ssub.s32 %s26, 2
        // Predicated region
        $region105: #{tpu_custom_call.1} parent=103 // pred_check
          %p1817 = pneg %p468
        $region106: #{tpu_custom_call.1} parent=103 // pred_check_branch
          %1819 = sbr.rel (%p1817) target = $region108
        $region107: #{tpu_custom_call.1} parent=103 // pred_region
          %s1820 = sand.u32 %s453, 1
          %s1821 = scalar_lea.sflag [#allocation7], %s1820
          %s1822 = sand.u32 %s453, 1
          %s1823 = smul.addr %s1822, 16
          %s1824 = scalar_lea.vmem [#allocation8], %s1823
          %1825 = dma.done %s1821, 256
        $region108: #{tpu_custom_call.1} parent=103 // pred_fallthru
          _
      $region104: #{tpu_custom_call.1} parent=5 // pred_fallthru
        _
    $region6: #{tpu_custom_call.1} parent=1 // loop_footer
      %s30 = sadd.s32 1, %s26
    $region7: #{tpu_custom_call.1} parent=1 // loop_footer_branch
      %25 = sbr.rel target = $region3
    $region8: #{tpu_custom_call.1} parent=1 // loop_exit
      _
    %1826 = vsyncpa [#allocation6], 1
    %s1827 = scalar_lea.sflag [#allocation6], 1
    %1828 = vsyncpa %s1827, 1
    %1829 = vsyncpa [#allocation7], 1
    %s1830 = scalar_lea.sflag [#allocation7], 1
    %1831 = vsyncpa %s1830, 1

</llo_original>
